<compile_context>
chip_gen: v7x
topology: tpu7x:2x2x1
jax: 0.10.0
libtpu: 0.0.40
codegen_flags: <defaults>
</compile_context>

<pallas_src>
import functools

import jax
import jax.numpy as jnp
from jax.experimental import pallas as pl
from jax.experimental.pallas import tpu as pltpu

EPS = 1e-5
NEG_SLOPE = 0.2
_MIN_TILE = 128                 # batch-tile granularity (MXU / (8,128) friendly)
_FUSED_MAX_B = 2 * _MIN_TILE    # below this, run one fused whole-batch block


# ---------------------------------------------------------------------------
# shared math helpers (all elementwise math in f32 -> v5e-safe)
# ---------------------------------------------------------------------------
def _leaky(z):
    return jnp.where(z >= 0, z, NEG_SLOPE * z)


def _bn_leaky_apply(z, mean, rstd):
    """Normalize with precomputed per-feature mean / rsqrt(var+eps), then LeakyReLU."""
    return _leaky((z - mean) * rstd)


def _bn_leaky_batch(z):
    """Whole-block BatchNorm1d (training stats, biased variance) + LeakyReLU."""
    mean = jnp.mean(z, axis=0, keepdims=True)
    var = jnp.mean(z * z, axis=0, keepdims=True) - mean * mean
    var = jnp.maximum(var, 0.0)        # single-pass variance can go slightly < 0
    return _bn_leaky_apply(z, mean, jax.lax.rsqrt(var + EPS))


def _matmul(a, w_ref, b_ref=None):
    """MXU matmul with bf16 operands and f32 accumulation (+ optional bias row)."""
    out = jnp.dot(a.astype(w_ref.dtype), w_ref[...],
                  preferred_element_type=jnp.float32)
    if b_ref is not None:
        out = out + b_ref[...]
    return out


def _partial_sums(z, tile_b, valid_b):
    """Per-tile partial sum / sum-of-squares, masking out zero-padded batch rows."""
    if valid_b % tile_b != 0:          # batch was padded -> exclude pad rows
        row = pl.program_id(0) * tile_b + jax.lax.broadcasted_iota(
            jnp.int32, z.shape, 0)
        z = jnp.where(row < valid_b, z, 0.0)
    s = jnp.sum(z, axis=0, keepdims=True)[None]        # (1, 1, H)
    q = jnp.sum(z * z, axis=0, keepdims=True)[None]    # (1, 1, H)
    return s, q


# ---------------------------------------------------------------------------
# kernels
# ---------------------------------------------------------------------------
def _fused_kernel(x_ref, w1_ref, b1_ref, w2_ref, b2_ref, wt_ref, o_ref):
    """Single-block path (small batch): whole-batch BN stats in-kernel."""
    z1 = _matmul(x_ref[...], w1_ref, b1_ref)
    h1 = _bn_leaky_batch(z1)                                    # block1
    z2 = _matmul(h1, w2_ref, b2_ref)
    h2 = h1 + _bn_leaky_batch(z2)                               # DisModule residual
    # tail Linear(H, 1, bias=False) as a VPU lane reduction (no N=1 MXU pass)
    o_ref[...] = jnp.sum(h2 * wt_ref[...], axis=1, keepdims=True)


# ---- recompute-z1 path (in_planes <= ~1.5*H): z1 never hits HBM ------------
def _stats1_rc_kernel(x_ref, w1_ref, b1_ref, s_ref, q_ref, *, tile_b, valid_b):
    z1 = _matmul(x_ref[...], w1_ref, b1_ref)
    s_ref[...], q_ref[...] = _partial_sums(z1, tile_b, valid_b)


def _stats2_rc_kernel(x_ref, w1_ref, b1_ref, m1_ref, r1_ref, w2_ref, b2_ref,
                      s_ref, q_ref, *, tile_b, valid_b):
    z1 = _matmul(x_ref[...], w1_ref, b1_ref)
    h1 = _bn_leaky_apply(z1, m1_ref[...], r1_ref[...])
    z2 = _matmul(h1, w2_ref, b2_ref)
    s_ref[...], q_ref[...] = _partial_sums(z2, tile_b, valid_b)


def _final_rc_kernel(x_ref, w1_ref, b1_ref, m1_ref, r1_ref, m2_ref, r2_ref,
                     w2_ref, b2_ref, wt_ref, o_ref):
    z1 = _matmul(x_ref[...], w1_ref, b1_ref)
    h1 = _bn_leaky_apply(z1, m1_ref[...], r1_ref[...])
    z2 = _matmul(h1, w2_ref, b2_ref)
    h2 = h1 + _bn_leaky_apply(z2, m2_ref[...], r2_ref[...])
    o_ref[...] = jnp.sum(h2 * wt_ref[...], axis=1, keepdims=True)


# ---- store-z1 path (in_planes >> H): z1 materialized once, in bf16 ---------
def _pass1_store_kernel(x_ref, w1_ref, b1_ref, z1_ref, s_ref, q_ref,
                        *, tile_b, valid_b):
    z1 = _matmul(x_ref[...], w1_ref, b1_ref)
    z1_ref[...] = z1.astype(z1_ref.dtype)       # bf16 round-trip (1 write, 2 reads)
    s_ref[...], q_ref[...] = _partial_sums(z1, tile_b, valid_b)


def _pass2_store_kernel(z1_ref, m1_ref, r1_ref, w2_ref, b2_ref, s_ref, q_ref,
                        *, tile_b, valid_b):
    h1 = _bn_leaky_apply(z1_ref[...].astype(jnp.float32), m1_ref[...], r1_ref[...])
    z2 = _matmul(h1, w2_ref, b2_ref)
    s_ref[...], q_ref[...] = _partial_sums(z2, tile_b, valid_b)


def _pass3_store_kernel(z1_ref, m1_ref, r1_ref, m2_ref, r2_ref,
                        w2_ref, b2_ref, wt_ref, o_ref):
    h1 = _bn_leaky_apply(z1_ref[...].astype(jnp.float32), m1_ref[...], r1_ref[...])
    z2 = _matmul(h1, w2_ref, b2_ref)
    h2 = h1 + _bn_leaky_apply(z2, m2_ref[...], r2_ref[...])
    o_ref[...] = jnp.sum(h2 * wt_ref[...], axis=1, keepdims=True)


# ---------------------------------------------------------------------------
# tiling / VMEM heuristics
# ---------------------------------------------------------------------------
def _vmem_budget_bytes():
    """~2/3 of physical VMEM (v7x: 64 MiB/TC -> ~42 MiB; v5e/v6e: 128 -> ~85)."""
    cap = 64 * 1024 * 1024                      # conservative fallback (v7x per-TC)
    try:
        cap = int(getattr(pltpu.get_tpu_info(), "vmem_capacity_bytes", cap))
    except Exception:
        pass
    return int(min(cap * 2 // 3, 96 * 1024 * 1024))


def _tile_footprint(tb, in_planes, H, store_z1):
    """Conservative per-grid-step VMEM estimate for the heaviest pass."""
    x_in = 2 * tb * in_planes * 4               # double-buffered f32 x tile
    z1_io = (2 * tb * H * 2) if store_z1 else 0  # double-buffered bf16 z1 tile
    w = 2 * (in_planes * H + H * H) * 2         # (double-buffered) bf16 weights
    live = 4 * tb * H * 4                       # in-kernel f32 intermediates
    return x_in + z1_io + w + live + 2 * tb * 4 + 16 * H * 4


def _pick_batch_tile(B, in_planes, H, budget, store_z1):
    fitting = [t for t in (2048, 1024, 512, 256, 128)
               if t <= B and _tile_footprint(t, in_planes, H, store_z1) <= budget]
    if not fitting:
        return _MIN_TILE   # pathological H; smallest tile, limit raised below

    def score(t):
        ntiles = -(-B // t)
        pad = ntiles * t - B
        # prefer: no padding, >=4 grid steps (pipelining + v7x megacore),
        # >=2 grid steps, minimal padding, then the largest tile.
        return (B % t == 0, ntiles >= 4, ntiles >= 2, -pad, t)

    return max(fitting, key=score)


def _full_spec(a):
    return pl.BlockSpec(a.shape, lambda: (0,) * a.ndim)


def _finish_stats(psum, psq, n):
    """Reduce per-tile partials -> per-feature mean and rsqrt(var+eps)."""
    mean = jnp.sum(psum, axis=0) / n                           # (1, H)
    var = jnp.maximum(jnp.sum(psq, axis=0) / n - mean * mean, 0.0)
    return mean, jax.lax.rsqrt(var + EPS)


# ---------------------------------------------------------------------------
# wrapper
# ---------------------------------------------------------------------------
def prepare_params(w1, b1, w2, b2, wt, mxu_dtype=jnp.bfloat16):
    """One-time parameter prep: hoists the f32->bf16 weight casts (and bias /
    tail-row reshapes) out of the per-step forward path."""
    H = w1.shape[1]
    return (w1.astype(mxu_dtype), b1.reshape(1, H).astype(jnp.float32),
            w2.astype(mxu_dtype), b2.reshape(1, H).astype(jnp.float32),
            wt.reshape(1, H).astype(jnp.float32))


def mlp_forward(x, w1, b1, w2, b2, wt, *, tile_b=None, mxu_dtype=jnp.bfloat16):
    """Forward pass of MLP(in_planes, n_layers=3, hidden), training-mode BN.

    x:[B,IN] f32, w1:[IN,H], b1:[H]/[1,H], w2:[H,H], b2:[H]/[1,H],
    wt:[H,1]/[1,H]  ->  [B,1] f32.
    Pass parameters through `prepare_params` once to avoid re-casting weights
    to bf16 on every step (the `.astype` below is then a no-op).
    """
    B, in_planes = x.shape
    H = w1.shape[1]

    x = x.astype(jnp.float32)
    w1m = w1.astype(mxu_dtype)          # no-op if already prepared
    w2m = w2.astype(mxu_dtype)
    b1r = b1.reshape(1, H).astype(jnp.float32)
    b2r = b2.reshape(1, H).astype(jnp.float32)
    wtr = wt.reshape(1, H).astype(jnp.float32)

    budget = _vmem_budget_bytes()

    # --- small-batch regime: whole batch in one block, one launch -----------
    if B < _FUSED_MAX_B:
        args = (x, w1m, b1r, w2m, b2r, wtr)
        return pl.pallas_call(
            _fused_kernel,
            out_shape=jax.ShapeDtypeStruct((B, 1), jnp.float32),
            in_specs=[_full_spec(a) for a in args],
            out_specs=pl.BlockSpec((B, 1), lambda: (0, 0)),
            compiler_params=pltpu.CompilerParams(vmem_limit_bytes=budget),
        )(*args)

    # --- tiled 3-pass path ---------------------------------------------------
    # z1 is either recomputed from the bf16 x tile in every pass (cheaper when
    # IN is small relative to H) or materialized once in bf16 (cheaper when
    # IN >> H).  3 * IN bytes/row  vs  IN + 3 * H bytes/row.
    recompute_z1 = (2 * in_planes <= 3 * H)
    store_z1 = not recompute_z1

    if tile_b is None:
        tile_b = _pick_batch_tile(B, in_planes, H, budget, store_z1)
    else:
        tile_b = max(_MIN_TILE, (int(tile_b) // _MIN_TILE) * _MIN_TILE)
    ntiles = -(-B // tile_b)
    padded_B = ntiles * tile_b
    if padded_B != B:
        # Ragged batch: zero-pad; padded rows are excluded from BN statistics
        # in-kernel and their output rows are sliced off below.
        x = jnp.pad(x, ((0, padded_B - B), (0, 0)))

    vmem_limit = int(max(budget, _tile_footprint(tile_b, in_planes, H, store_z1)))
    cparams = pltpu.CompilerParams(
        dimension_semantics=("parallel",),   # batch tiles split across v7x cores
        vmem_limit_bytes=vmem_limit,
    )

    x_spec = pl.BlockSpec((tile_b, in_planes), lambda i: (i, 0))
    w1_spec = pl.BlockSpec((in_planes, H), lambda i: (0, 0))
    w2_spec = pl.BlockSpec((H, H), lambda i: (0, 0))
    row_spec = pl.BlockSpec((1, H), lambda i: (0, 0))            # broadcast rows
    stat_spec = pl.BlockSpec((1, 1, H), lambda i: (i, 0, 0))     # per-tile partials
    out_spec = pl.BlockSpec((tile_b, 1), lambda i: (i, 0))
    stat_shape = jax.ShapeDtypeStruct((ntiles, 1, H), jnp.float32)

    if recompute_z1:
        s1, q1 = pl.pallas_call(
            functools.partial(_stats1_rc_kernel, tile_b=tile_b, valid_b=B),
            out_shape=(stat_shape, stat_shape),
            grid=(ntiles,),
            in_specs=[x_spec, w1_spec, row_spec],
            out_specs=(stat_spec, stat_spec),
            compiler_params=cparams,
        )(x, w1m, b1r)
        mean1, rstd1 = _finish_stats(s1, q1, B)

        s2, q2 = pl.pallas_call(
            functools.partial(_stats2_rc_kernel, tile_b=tile_b, valid_b=B),
            out_shape=(stat_shape, stat_shape),
            grid=(ntiles,),
            in_specs=[x_spec, w1_spec, row_spec, row_spec, row_spec,
                      w2_spec, row_spec],
            out_specs=(stat_spec, stat_spec),
            compiler_params=cparams,
        )(x, w1m, b1r, mean1, rstd1, w2m, b2r)
        mean2, rstd2 = _finish_stats(s2, q2, B)

        out = pl.pallas_call(
            _final_rc_kernel,
            out_shape=jax.ShapeDtypeStruct((padded_B, 1), jnp.float32),
            grid=(ntiles,),
            in_specs=[x_spec, w1_spec, row_spec, row_spec, row_spec,
                      row_spec, row_spec, w2_spec, row_spec, row_spec],
            out_specs=out_spec,
            compiler_params=cparams,
        )(x, w1m, b1r, mean1, rstd1, mean2, rstd2, w2m, b2r, wtr)
    else:
        z_spec = pl.BlockSpec((tile_b, H), lambda i: (i, 0))
        z1, s1, q1 = pl.pallas_call(
            functools.partial(_pass1_store_kernel, tile_b=tile_b, valid_b=B),
            out_shape=(jax.ShapeDtypeStruct((padded_B, H), mxu_dtype),
                       stat_shape, stat_shape),
            grid=(ntiles,),
            in_specs=[x_spec, w1_spec, row_spec],
            out_specs=(z_spec, stat_spec, stat_spec),
            compiler_params=cparams,
        )(x, w1m, b1r)
        mean1, rstd1 = _finish_stats(s1, q1, B)

        s2, q2 = pl.pallas_call(
            functools.partial(_pass2_store_kernel, tile_b=tile_b, valid_b=B),
            out_shape=(stat_shape, stat_shape),
            grid=(ntiles,),
            in_specs=[z_spec, row_spec, row_spec, w2_spec, row_spec],
            out_specs=(stat_spec, stat_spec),
            compiler_params=cparams,
        )(z1, mean1, rstd1, w2m, b2r)
        mean2, rstd2 = _finish_stats(s2, q2, B)

        out = pl.pallas_call(
            _pass3_store_kernel,
            out_shape=jax.ShapeDtypeStruct((padded_B, 1), jnp.float32),
            grid=(ntiles,),
            in_specs=[z_spec, row_spec, row_spec, row_spec, row_spec,
                      w2_spec, row_spec, row_spec],
            out_specs=out_spec,
            compiler_params=cparams,
        )(z1, mean1, rstd1, mean2, rstd2, w2m, b2r, wtr)

    if padded_B != B:
        out = out[:B]
    return out


# ---------------------------------------------------------------------------
# pure-JAX reference (same bf16 MXU casts) and torch-matching parameter init
# ---------------------------------------------------------------------------
def mlp_reference(x, w1, b1, w2, b2, wt, mxu_dtype=jnp.bfloat16):
    H = w1.shape[1]

    def mdot(a, b):
        return jnp.dot(a.astype(mxu_dtype), b.astype(mxu_dtype),
                       preferred_element_type=jnp.float32)

    z1 = mdot(x, w1) + b1.reshape(1, H)
    h1 = _bn_leaky_batch(z1)
    z2 = mdot(h1, w2) + b2.reshape(1, H)
    h2 = h1 + _bn_leaky_batch(z2)
    return h2 @ wt.reshape(H, 1).astype(jnp.float32)


def xavier_normal(key, fan_in, fan_out):
    # torch.nn.init.xavier_normal_ (gain=1): std = sqrt(2 / (fan_in + fan_out))
    std = (2.0 / (fan_in + fan_out)) ** 0.5
    return std * jax.random.normal(key, (fan_in, fan_out), dtype=jnp.float32)


def make_params(key, in_planes, hidden):
    k1, k2, k3, k4, k5 = jax.random.split(key, 5)
    # Linear weights stored [in, out] (transposed vs torch's [out, in]).
    w1 = xavier_normal(k1, in_planes, hidden)
    w2 = xavier_normal(k2, hidden, hidden)
    wt = xavier_normal(k3, hidden, 1)
    bnd1 = 1.0 / (in_planes ** 0.5)
    bnd2 = 1.0 / (hidden ** 0.5)
    b1 = jax.random.uniform(k4, (1, hidden), jnp.float32, -bnd1, bnd1)
    b2 = jax.random.uniform(k5, (1, hidden), jnp.float32, -bnd2, bnd2)
    return w1, b1, w2, b2, wt


if __name__ == "__main__":
    key = jax.random.PRNGKey(0)
    k = jax.random.split(key, 6)
    fwd = jax.jit(mlp_forward)

    # 1) tiled path, z1 recomputed from x (IN <= 1.5*H), exact batch tiling
    B1, IN1, H1 = 512, 64, 128
    x1 = jax.random.normal(k[0], (B1, IN1), dtype=jnp.float32)
    p1 = make_params(k[1], IN1, H1)
    out1 = fwd(x1, *prepare_params(*p1))
    jax.block_until_ready(out1)
    assert out1.shape == (B1, 1), out1.shape
    ref1 = mlp_reference(x1, *p1)
    assert jnp.allclose(out1, ref1, atol=2e-2, rtol=2e-2), \
        float(jnp.max(jnp.abs(out1 - ref1)))

    # 2) tiled path, bf16 z1 materialized (IN >> H), ragged batch (pad + mask)
    B2, IN2, H2 = 300, 384, 128
    x2 = jax.random.normal(k[2], (B2, IN2), dtype=jnp.float32)
    p2 = make_params(k[3], IN2, H2)
    out2 = fwd(x2, *prepare_params(*p2))
    jax.block_until_ready(out2)
    assert out2.shape == (B2, 1), out2.shape
    ref2 = mlp_reference(x2, *p2)
    assert jnp.allclose(out2, ref2, atol=2e-2, rtol=2e-2), \
        float(jnp.max(jnp.abs(out2 - ref2)))

    # 3) small-batch fused single-block path (toy shape)
    B3, IN3, H3 = 8, 32, 32
    x3 = jax.random.normal(k[4], (B3, IN3), dtype=jnp.float32)
    p3 = make_params(k[5], IN3, H3)
    out3 = fwd(x3, *prepare_params(*p3))
    jax.block_until_ready(out3)
    assert out3.shape == (B3, 1), out3.shape
    ref3 = mlp_reference(x3, *p3)
    assert jnp.allclose(out3, ref3, atol=2e-2, rtol=2e-2), \
        float(jnp.max(jnp.abs(out3 - ref3)))

    print("KERNEL_OK")
</pallas_src>

<mosaic_0001>
module attributes {stable_mosaic.version = 11 : i64} {
  func.func @_stats1_rc_kernel(%arg0: i32, %arg1: memref<128x64xf32, #tpu.memory_space<vmem>>, %arg2: memref<64x128xbf16, #tpu.memory_space<vmem>>, %arg3: memref<1x128xf32, #tpu.memory_space<vmem>>, %arg4: memref<1x1x128xf32, #tpu.memory_space<vmem>>, %arg5: memref<1x1x128xf32, #tpu.memory_space<vmem>>) attributes {dimension_semantics = [#tpu.dimension_semantics<parallel>], iteration_bounds = array<i64: 4>, scalar_prefetch = 0 : i64, scratch_operands = 0 : i64, tpu.core_type = #tpu.core_type<tc>, window_params = [{transform_indices = @transform_0, window_bounds = array<i64: 128, 64>}, {pipeline_mode = #tpu.pipeline_mode<synchronous>, transform_indices = @transform_1, window_bounds = array<i64: 64, 128>}, {pipeline_mode = #tpu.pipeline_mode<synchronous>, transform_indices = @transform_2, window_bounds = array<i64: 1, 128>}, {transform_indices = @transform_3, window_bounds = array<i64: 1, 1, 128>}, {transform_indices = @transform_4, window_bounds = array<i64: 1, 1, 128>}]} {
    %c0 = arith.constant 0 : index
    %c0_0 = arith.constant 0 : index
    %0 = vector.load %arg1[%c0, %c0_0] : memref<128x64xf32, #tpu.memory_space<vmem>>, vector<128x64xf32>
    %1 = arith.truncf %0 : vector<128x64xf32> to vector<128x64xbf16>
    %c0_1 = arith.constant 0 : index
    %c0_2 = arith.constant 0 : index
    %2 = vector.load %arg2[%c0_1, %c0_2] : memref<64x128xbf16, #tpu.memory_space<vmem>>, vector<64x128xbf16>
    %cst = arith.constant dense<0.000000e+00> : vector<128x128xf32>
    %3 = tpu.matmul %1, %2, %cst {dimension_numbers = #tpu.dot_dimension_numbers<[1], [0], [0], [1], [0, 0, 1, 1], [], []>} : vector<128x64xbf16>, vector<64x128xbf16>, vector<128x128xf32> -> vector<128x128xf32>
    %c0_3 = arith.constant 0 : index
    %c0_4 = arith.constant 0 : index
    %4 = vector.load %arg3[%c0_3, %c0_4] : memref<1x128xf32, #tpu.memory_space<vmem>>, vector<1x128xf32>
    %5 = vector.broadcast %4 : vector<1x128xf32> to vector<128x128xf32>
    %6 = arith.addf %3, %5 : vector<128x128xf32>
    %cst_5 = arith.constant dense<0.000000e+00> : vector<128xf32>
    %7 = vector.multi_reduction <add>, %6, %cst_5 [0] : vector<128x128xf32> to vector<128xf32>
    %8 = vector.shape_cast %7 : vector<128xf32> to vector<1x128xf32>
    %9 = vector.shape_cast %8 : vector<1x128xf32> to vector<1x1x128xf32>
    %10 = arith.mulf %6, %6 : vector<128x128xf32>
    %cst_6 = arith.constant dense<0.000000e+00> : vector<128xf32>
    %11 = vector.multi_reduction <add>, %10, %cst_6 [0] : vector<128x128xf32> to vector<128xf32>
    %12 = vector.shape_cast %11 : vector<128xf32> to vector<1x128xf32>
    %13 = vector.shape_cast %12 : vector<1x128xf32> to vector<1x1x128xf32>
    %c0_7 = arith.constant 0 : index
    %c0_8 = arith.constant 0 : index
    %c0_9 = arith.constant 0 : index
    %14 = vector.load %arg4[%c0_7, %c0_8, %c0_9] : memref<1x1x128xf32, #tpu.memory_space<vmem>>, vector<1x1x128xf32>
    tpu.vector_store %arg4[%c0_7, %c0_8, %c0_9], %9 {strides = array<i32>} : memref<1x1x128xf32, #tpu.memory_space<vmem>>, vector<1x1x128xf32>,
    %c0_10 = arith.constant 0 : index
    %c0_11 = arith.constant 0 : index
    %c0_12 = arith.constant 0 : index
    %15 = vector.load %arg5[%c0_10, %c0_11, %c0_12] : memref<1x1x128xf32, #tpu.memory_space<vmem>>, vector<1x1x128xf32>
    tpu.vector_store %arg5[%c0_10, %c0_11, %c0_12], %13 {strides = array<i32>} : memref<1x1x128xf32, #tpu.memory_space<vmem>>, vector<1x1x128xf32>,
    return
  }
  func.func @transform_0(%arg0: i32) -> (i32, i32) {
    %c0_i32 = arith.constant 0 : i32
    %c0_i32_0 = arith.constant 0 : i32
    return %arg0, %c0_i32 : i32, i32
  }
  func.func @transform_1(%arg0: i32) -> (i32, i32) {
    %c0_i32 = arith.constant 0 : i32
    %c0_i32_0 = arith.constant 0 : i32
    %c0_i32_1 = arith.constant 0 : i32
    return %c0_i32, %c0_i32_0 : i32, i32
  }
  func.func @transform_2(%arg0: i32) -> (i32, i32) {
    %c0_i32 = arith.constant 0 : i32
    %c0_i32_0 = arith.constant 0 : i32
    %c0_i32_1 = arith.constant 0 : i32
    return %c0_i32, %c0_i32_0 : i32, i32
  }
  func.func @transform_3(%arg0: i32) -> (i32, i32, i32) {
    %c0_i32 = arith.constant 0 : i32
    %c0_i32_0 = arith.constant 0 : i32
    %c0_i32_1 = arith.constant 0 : i32
    return %arg0, %c0_i32, %c0_i32_0 : i32, i32, i32
  }
  func.func @transform_4(%arg0: i32) -> (i32, i32, i32) {
    %c0_i32 = arith.constant 0 : i32
    %c0_i32_0 = arith.constant 0 : i32
    %c0_i32_1 = arith.constant 0 : i32
    return %arg0, %c0_i32, %c0_i32_0 : i32, i32, i32
  }
}

module attributes {stable_mosaic.version = 11 : i64} {
  func.func @_final_rc_kernel(%arg0: i32, %arg1: memref<128x64xf32, #tpu.memory_space<vmem>>, %arg2: memref<64x128xbf16, #tpu.memory_space<vmem>>, %arg3: memref<1x128xf32, #tpu.memory_space<vmem>>, %arg4: memref<1x128xf32, #tpu.memory_space<vmem>>, %arg5: memref<1x128xf32, #tpu.memory_space<vmem>>, %arg6: memref<1x128xf32, #tpu.memory_space<vmem>>, %arg7: memref<1x128xf32, #tpu.memory_space<vmem>>, %arg8: memref<128x128xbf16, #tpu.memory_space<vmem>>, %arg9: memref<1x128xf32, #tpu.memory_space<vmem>>, %arg10: memref<1x128xf32, #tpu.memory_space<vmem>>, %arg11: memref<128x1xf32, #tpu.memory_space<vmem>>) attributes {dimension_semantics = [#tpu.dimension_semantics<parallel>], iteration_bounds = array<i64: 4>, scalar_prefetch = 0 : i64, scratch_operands = 0 : i64, tpu.core_type = #tpu.core_type<tc>, window_params = [{transform_indices = @transform_0, window_bounds = array<i64: 128, 64>}, {pipeline_mode = #tpu.pipeline_mode<synchronous>, transform_indices = @transform_1, window_bounds = array<i64: 64, 128>}, {pipeline_mode = #tpu.pipeline_mode<synchronous>, transform_indices = @transform_2, window_bounds = array<i64: 1, 128>}, {pipeline_mode = #tpu.pipeline_mode<synchronous>, transform_indices = @transform_3, window_bounds = array<i64: 1, 128>}, {pipeline_mode = #tpu.pipeline_mode<synchronous>, transform_indices = @transform_4, window_bounds = array<i64: 1, 128>}, {pipeline_mode = #tpu.pipeline_mode<synchronous>, transform_indices = @transform_5, window_bounds = array<i64: 1, 128>}, {pipeline_mode = #tpu.pipeline_mode<synchronous>, transform_indices = @transform_6, window_bounds = array<i64: 1, 128>}, {pipeline_mode = #tpu.pipeline_mode<synchronous>, transform_indices = @transform_7, window_bounds = array<i64: 128, 128>}, {pipeline_mode = #tpu.pipeline_mode<synchronous>, transform_indices = @transform_8, window_bounds = array<i64: 1, 128>}, {pipeline_mode = #tpu.pipeline_mode<synchronous>, transform_indices = @transform_9, window_bounds = array<i64: 1, 128>}, {transform_indices = @transform_10, window_bounds = array<i64: 128, 1>}]} {
    %c0 = arith.constant 0 : index
    %c0_0 = arith.constant 0 : index
    %0 = vector.load %arg1[%c0, %c0_0] : memref<128x64xf32, #tpu.memory_space<vmem>>, vector<128x64xf32>
    %1 = arith.truncf %0 : vector<128x64xf32> to vector<128x64xbf16>
    %c0_1 = arith.constant 0 : index
    %c0_2 = arith.constant 0 : index
    %2 = vector.load %arg2[%c0_1, %c0_2] : memref<64x128xbf16, #tpu.memory_space<vmem>>, vector<64x128xbf16>
    %cst = arith.constant dense<0.000000e+00> : vector<128x128xf32>
    %3 = tpu.matmul %1, %2, %cst {dimension_numbers = #tpu.dot_dimension_numbers<[1], [0], [0], [1], [0, 0, 1, 1], [], []>} : vector<128x64xbf16>, vector<64x128xbf16>, vector<128x128xf32> -> vector<128x128xf32>
    %c0_3 = arith.constant 0 : index
    %c0_4 = arith.constant 0 : index
    %4 = vector.load %arg3[%c0_3, %c0_4] : memref<1x128xf32, #tpu.memory_space<vmem>>, vector<1x128xf32>
    %5 = vector.broadcast %4 : vector<1x128xf32> to vector<128x128xf32>
    %6 = arith.addf %3, %5 : vector<128x128xf32>
    %c0_5 = arith.constant 0 : index
    %c0_6 = arith.constant 0 : index
    %7 = vector.load %arg4[%c0_5, %c0_6] : memref<1x128xf32, #tpu.memory_space<vmem>>, vector<1x128xf32>
    %c0_7 = arith.constant 0 : index
    %c0_8 = arith.constant 0 : index
    %8 = vector.load %arg5[%c0_7, %c0_8] : memref<1x128xf32, #tpu.memory_space<vmem>>, vector<1x128xf32>
    %9 = vector.broadcast %7 : vector<1x128xf32> to vector<128x128xf32>
    %10 = arith.subf %6, %9 : vector<128x128xf32>
    %11 = vector.broadcast %8 : vector<1x128xf32> to vector<128x128xf32>
    %12 = arith.mulf %10, %11 : vector<128x128xf32>
    %cst_9 = arith.constant 0.000000e+00 : f32
    %13 = vector.broadcast %cst_9 : f32 to vector<128x128xf32>
    %14 = arith.cmpf oge, %12, %13 : vector<128x128xf32>
    %cst_10 = arith.constant 2.000000e-01 : f32
    %15 = vector.broadcast %cst_10 : f32 to vector<128x128xf32>
    %16 = arith.mulf %15, %12 : vector<128x128xf32>
    %17 = arith.select %14, %12, %16 : vector<128x128xi1>, vector<128x128xf32>
    %18 = arith.truncf %17 : vector<128x128xf32> to vector<128x128xbf16>
    %c0_11 = arith.constant 0 : index
    %c0_12 = arith.constant 0 : index
    %19 = vector.load %arg8[%c0_11, %c0_12] : memref<128x128xbf16, #tpu.memory_space<vmem>>, vector<128x128xbf16>
    %cst_13 = arith.constant dense<0.000000e+00> : vector<128x128xf32>
    %20 = tpu.matmul %18, %19, %cst_13 {dimension_numbers = #tpu.dot_dimension_numbers<[1], [0], [0], [1], [0, 0, 1, 1], [], []>} : vector<128x128xbf16>, vector<128x128xbf16>, vector<128x128xf32> -> vector<128x128xf32>
    %c0_14 = arith.constant 0 : index
    %c0_15 = arith.constant 0 : index
    %21 = vector.load %arg9[%c0_14, %c0_15] : memref<1x128xf32, #tpu.memory_space<vmem>>, vector<1x128xf32>
    %22 = vector.broadcast %21 : vector<1x128xf32> to vector<128x128xf32>
    %23 = arith.addf %20, %22 : vector<128x128xf32>
    %c0_16 = arith.constant 0 : index
    %c0_17 = arith.constant 0 : index
    %24 = vector.load %arg6[%c0_16, %c0_17] : memref<1x128xf32, #tpu.memory_space<vmem>>, vector<1x128xf32>
    %c0_18 = arith.constant 0 : index
    %c0_19 = arith.constant 0 : index
    %25 = vector.load %arg7[%c0_18, %c0_19] : memref<1x128xf32, #tpu.memory_space<vmem>>, vector<1x128xf32>
    %26 = vector.broadcast %24 : vector<1x128xf32> to vector<128x128xf32>
    %27 = arith.subf %23, %26 : vector<128x128xf32>
    %28 = vector.broadcast %25 : vector<1x128xf32> to vector<128x128xf32>
    %29 = arith.mulf %27, %28 : vector<128x128xf32>
    %cst_20 = arith.constant 0.000000e+00 : f32
    %30 = vector.broadcast %cst_20 : f32 to vector<128x128xf32>
    %31 = arith.cmpf oge, %29, %30 : vector<128x128xf32>
    %cst_21 = arith.constant 2.000000e-01 : f32
    %32 = vector.broadcast %cst_21 : f32 to vector<128x128xf32>
    %33 = arith.mulf %32, %29 : vector<128x128xf32>
    %34 = arith.select %31, %29, %33 : vector<128x128xi1>, vector<128x128xf32>
    %35 = arith.addf %17, %34 : vector<128x128xf32>
    %c0_22 = arith.constant 0 : index
    %c0_23 = arith.constant 0 : index
    %36 = vector.load %arg10[%c0_22, %c0_23] : memref<1x128xf32, #tpu.memory_space<vmem>>, vector<1x128xf32>
    %37 = vector.broadcast %36 : vector<1x128xf32> to vector<128x128xf32>
    %38 = arith.mulf %35, %37 : vector<128x128xf32>
    %cst_24 = arith.constant dense<0.000000e+00> : vector<128xf32>
    %39 = vector.multi_reduction <add>, %38, %cst_24 [1] : vector<128x128xf32> to vector<128xf32>
    %40 = vector.shape_cast %39 : vector<128xf32> to vector<128x1xf32>
    %c0_25 = arith.constant 0 : index
    %c0_26 = arith.constant 0 : index
    %41 = vector.load %arg11[%c0_25, %c0_26] : memref<128x1xf32, #tpu.memory_space<vmem>>, vector<128x1xf32>
    tpu.vector_store %arg11[%c0_25, %c0_26], %40 {strides = array<i32>} : memref<128x1xf32, #tpu.memory_space<vmem>>, vector<128x1xf32>,
    return
  }
  func.func @transform_0(%arg0: i32) -> (i32, i32) {
    %c0_i32 = arith.constant 0 : i32
    %c0_i32_0 = arith.constant 0 : i32
    return %arg0, %c0_i32 : i32, i32
  }
  func.func @transform_1(%arg0: i32) -> (i32, i32) {
    %c0_i32 = arith.constant 0 : i32
    %c0_i32_0 = arith.constant 0 : i32
    %c0_i32_1 = arith.constant 0 : i32
    return %c0_i32, %c0_i32_0 : i32, i32
  }
  func.func @transform_2(%arg0: i32) -> (i32, i32) {
    %c0_i32 = arith.constant 0 : i32
    %c0_i32_0 = arith.constant 0 : i32
    %c0_i32_1 = arith.constant 0 : i32
    return %c0_i32, %c0_i32_0 : i32, i32
  }
  func.func @transform_3(%arg0: i32) -> (i32, i32) {
    %c0_i32 = arith.constant 0 : i32
    %c0_i32_0 = arith.constant 0 : i32
    %c0_i32_1 = arith.constant 0 : i32
    return %c0_i32, %c0_i32_0 : i32, i32
  }
  func.func @transform_4(%arg0: i32) -> (i32, i32) {
    %c0_i32 = arith.constant 0 : i32
    %c0_i32_0 = arith.constant 0 : i32
    %c0_i32_1 = arith.constant 0 : i32
    return %c0_i32, %c0_i32_0 : i32, i32
  }
  func.func @transform_5(%arg0: i32) -> (i32, i32) {
    %c0_i32 = arith.constant 0 : i32
    %c0_i32_0 = arith.constant 0 : i32
    %c0_i32_1 = arith.constant 0 : i32
    return %c0_i32, %c0_i32_0 : i32, i32
  }
  func.func @transform_6(%arg0: i32) -> (i32, i32) {
    %c0_i32 = arith.constant 0 : i32
    %c0_i32_0 = arith.constant 0 : i32
    %c0_i32_1 = arith.constant 0 : i32
    return %c0_i32, %c0_i32_0 : i32, i32
  }
  func.func @transform_7(%arg0: i32) -> (i32, i32) {
    %c0_i32 = arith.constant 0 : i32
    %c0_i32_0 = arith.constant 0 : i32
    %c0_i32_1 = arith.constant 0 : i32
    return %c0_i32, %c0_i32_0 : i32, i32
  }
  func.func @transform_8(%arg0: i32) -> (i32, i32) {
    %c0_i32 = arith.constant 0 : i32
    %c0_i32_0 = arith.constant 0 : i32
    %c0_i32_1 = arith.constant 0 : i32
    return %c0_i32, %c0_i32_0 : i32, i32
  }
  func.func @transform_9(%arg0: i32) -> (i32, i32) {
    %c0_i32 = arith.constant 0 : i32
    %c0_i32_0 = arith.constant 0 : i32
    %c0_i32_1 = arith.constant 0 : i32
    return %c0_i32, %c0_i32_0 : i32, i32
  }
  func.func @transform_10(%arg0: i32) -> (i32, i32) {
    %c0_i32 = arith.constant 0 : i32
    %c0_i32_0 = arith.constant 0 : i32
    return %arg0, %c0_i32 : i32, i32
  }
}

module attributes {stable_mosaic.version = 11 : i64} {
  func.func @_stats2_rc_kernel(%arg0: i32, %arg1: memref<128x64xf32, #tpu.memory_space<vmem>>, %arg2: memref<64x128xbf16, #tpu.memory_space<vmem>>, %arg3: memref<1x128xf32, #tpu.memory_space<vmem>>, %arg4: memref<1x128xf32, #tpu.memory_space<vmem>>, %arg5: memref<1x128xf32, #tpu.memory_space<vmem>>, %arg6: memref<128x128xbf16, #tpu.memory_space<vmem>>, %arg7: memref<1x128xf32, #tpu.memory_space<vmem>>, %arg8: memref<1x1x128xf32, #tpu.memory_space<vmem>>, %arg9: memref<1x1x128xf32, #tpu.memory_space<vmem>>) attributes {dimension_semantics = [#tpu.dimension_semantics<parallel>], iteration_bounds = array<i64: 4>, scalar_prefetch = 0 : i64, scratch_operands = 0 : i64, tpu.core_type = #tpu.core_type<tc>, window_params = [{transform_indices = @transform_0, window_bounds = array<i64: 128, 64>}, {pipeline_mode = #tpu.pipeline_mode<synchronous>, transform_indices = @transform_1, window_bounds = array<i64: 64, 128>}, {pipeline_mode = #tpu.pipeline_mode<synchronous>, transform_indices = @transform_2, window_bounds = array<i64: 1, 128>}, {pipeline_mode = #tpu.pipeline_mode<synchronous>, transform_indices = @transform_3, window_bounds = array<i64: 1, 128>}, {pipeline_mode = #tpu.pipeline_mode<synchronous>, transform_indices = @transform_4, window_bounds = array<i64: 1, 128>}, {pipeline_mode = #tpu.pipeline_mode<synchronous>, transform_indices = @transform_5, window_bounds = array<i64: 128, 128>}, {pipeline_mode = #tpu.pipeline_mode<synchronous>, transform_indices = @transform_6, window_bounds = array<i64: 1, 128>}, {transform_indices = @transform_7, window_bounds = array<i64: 1, 1, 128>}, {transform_indices = @transform_8, window_bounds = array<i64: 1, 1, 128>}]} {
    %c0 = arith.constant 0 : index
    %c0_0 = arith.constant 0 : index
    %0 = vector.load %arg1[%c0, %c0_0] : memref<128x64xf32, #tpu.memory_space<vmem>>, vector<128x64xf32>
    %1 = arith.truncf %0 : vector<128x64xf32> to vector<128x64xbf16>
    %c0_1 = arith.constant 0 : index
    %c0_2 = arith.constant 0 : index
    %2 = vector.load %arg2[%c0_1, %c0_2] : memref<64x128xbf16, #tpu.memory_space<vmem>>, vector<64x128xbf16>
    %cst = arith.constant dense<0.000000e+00> : vector<128x128xf32>
    %3 = tpu.matmul %1, %2, %cst {dimension_numbers = #tpu.dot_dimension_numbers<[1], [0], [0], [1], [0, 0, 1, 1], [], []>} : vector<128x64xbf16>, vector<64x128xbf16>, vector<128x128xf32> -> vector<128x128xf32>
    %c0_3 = arith.constant 0 : index
    %c0_4 = arith.constant 0 : index
    %4 = vector.load %arg3[%c0_3, %c0_4] : memref<1x128xf32, #tpu.memory_space<vmem>>, vector<1x128xf32>
    %5 = vector.broadcast %4 : vector<1x128xf32> to vector<128x128xf32>
    %6 = arith.addf %3, %5 : vector<128x128xf32>
    %c0_5 = arith.constant 0 : index
    %c0_6 = arith.constant 0 : index
    %7 = vector.load %arg4[%c0_5, %c0_6] : memref<1x128xf32, #tpu.memory_space<vmem>>, vector<1x128xf32>
    %c0_7 = arith.constant 0 : index
    %c0_8 = arith.constant 0 : index
    %8 = vector.load %arg5[%c0_7, %c0_8] : memref<1x128xf32, #tpu.memory_space<vmem>>, vector<1x128xf32>
    %9 = vector.broadcast %7 : vector<1x128xf32> to vector<128x128xf32>
    %10 = arith.subf %6, %9 : vector<128x128xf32>
    %11 = vector.broadcast %8 : vector<1x128xf32> to vector<128x128xf32>
    %12 = arith.mulf %10, %11 : vector<128x128xf32>
    %cst_9 = arith.constant 0.000000e+00 : f32
    %13 = vector.broadcast %cst_9 : f32 to vector<128x128xf32>
    %14 = arith.cmpf oge, %12, %13 : vector<128x128xf32>
    %cst_10 = arith.constant 2.000000e-01 : f32
    %15 = vector.broadcast %cst_10 : f32 to vector<128x128xf32>
    %16 = arith.mulf %15, %12 : vector<128x128xf32>
    %17 = arith.select %14, %12, %16 : vector<128x128xi1>, vector<128x128xf32>
    %18 = arith.truncf %17 : vector<128x128xf32> to vector<128x128xbf16>
    %c0_11 = arith.constant 0 : index
    %c0_12 = arith.constant 0 : index
    %19 = vector.load %arg6[%c0_11, %c0_12] : memref<128x128xbf16, #tpu.memory_space<vmem>>, vector<128x128xbf16>
    %cst_13 = arith.constant dense<0.000000e+00> : vector<128x128xf32>
    %20 = tpu.matmul %18, %19, %cst_13 {dimension_numbers = #tpu.dot_dimension_numbers<[1], [0], [0], [1], [0, 0, 1, 1], [], []>} : vector<128x128xbf16>, vector<128x128xbf16>, vector<128x128xf32> -> vector<128x128xf32>
    %c0_14 = arith.constant 0 : index
    %c0_15 = arith.constant 0 : index
    %21 = vector.load %arg7[%c0_14, %c0_15] : memref<1x128xf32, #tpu.memory_space<vmem>>, vector<1x128xf32>
    %22 = vector.broadcast %21 : vector<1x128xf32> to vector<128x128xf32>
    %23 = arith.addf %20, %22 : vector<128x128xf32>
    %cst_16 = arith.constant dense<0.000000e+00> : vector<128xf32>
    %24 = vector.multi_reduction <add>, %23, %cst_16 [0] : vector<128x128xf32> to vector<128xf32>
    %25 = vector.shape_cast %24 : vector<128xf32> to vector<1x128xf32>
    %26 = vector.shape_cast %25 : vector<1x128xf32> to vector<1x1x128xf32>
    %27 = arith.mulf %23, %23 : vector<128x128xf32>
    %cst_17 = arith.constant dense<0.000000e+00> : vector<128xf32>
    %28 = vector.multi_reduction <add>, %27, %cst_17 [0] : vector<128x128xf32> to vector<128xf32>
    %29 = vector.shape_cast %28 : vector<128xf32> to vector<1x128xf32>
    %30 = vector.shape_cast %29 : vector<1x128xf32> to vector<1x1x128xf32>
    %c0_18 = arith.constant 0 : index
    %c0_19 = arith.constant 0 : index
    %c0_20 = arith.constant 0 : index
    %31 = vector.load %arg8[%c0_18, %c0_19, %c0_20] : memref<1x1x128xf32, #tpu.memory_space<vmem>>, vector<1x1x128xf32>
    tpu.vector_store %arg8[%c0_18, %c0_19, %c0_20], %26 {strides = array<i32>} : memref<1x1x128xf32, #tpu.memory_space<vmem>>, vector<1x1x128xf32>,
    %c0_21 = arith.constant 0 : index
    %c0_22 = arith.constant 0 : index
    %c0_23 = arith.constant 0 : index
    %32 = vector.load %arg9[%c0_21, %c0_22, %c0_23] : memref<1x1x128xf32, #tpu.memory_space<vmem>>, vector<1x1x128xf32>
    tpu.vector_store %arg9[%c0_21, %c0_22, %c0_23], %30 {strides = array<i32>} : memref<1x1x128xf32, #tpu.memory_space<vmem>>, vector<1x1x128xf32>,
    return
  }
  func.func @transform_0(%arg0: i32) -> (i32, i32) {
    %c0_i32 = arith.constant 0 : i32
    %c0_i32_0 = arith.constant 0 : i32
    return %arg0, %c0_i32 : i32, i32
  }
  func.func @transform_1(%arg0: i32) -> (i32, i32) {
    %c0_i32 = arith.constant 0 : i32
    %c0_i32_0 = arith.constant 0 : i32
    %c0_i32_1 = arith.constant 0 : i32
    return %c0_i32, %c0_i32_0 : i32, i32
  }
  func.func @transform_2(%arg0: i32) -> (i32, i32) {
    %c0_i32 = arith.constant 0 : i32
    %c0_i32_0 = arith.constant 0 : i32
    %c0_i32_1 = arith.constant 0 : i32
    return %c0_i32, %c0_i32_0 : i32, i32
  }
  func.func @transform_3(%arg0: i32) -> (i32, i32) {
    %c0_i32 = arith.constant 0 : i32
    %c0_i32_0 = arith.constant 0 : i32
    %c0_i32_1 = arith.constant 0 : i32
    return %c0_i32, %c0_i32_0 : i32, i32
  }
  func.func @transform_4(%arg0: i32) -> (i32, i32) {
    %c0_i32 = arith.constant 0 : i32
    %c0_i32_0 = arith.constant 0 : i32
    %c0_i32_1 = arith.constant 0 : i32
    return %c0_i32, %c0_i32_0 : i32, i32
  }
  func.func @transform_5(%arg0: i32) -> (i32, i32) {
    %c0_i32 = arith.constant 0 : i32
    %c0_i32_0 = arith.constant 0 : i32
    %c0_i32_1 = arith.constant 0 : i32
    return %c0_i32, %c0_i32_0 : i32, i32
  }
  func.func @transform_6(%arg0: i32) -> (i32, i32) {
    %c0_i32 = arith.constant 0 : i32
    %c0_i32_0 = arith.constant 0 : i32
    %c0_i32_1 = arith.constant 0 : i32
    return %c0_i32, %c0_i32_0 : i32, i32
  }
  func.func @transform_7(%arg0: i32) -> (i32, i32, i32) {
    %c0_i32 = arith.constant 0 : i32
    %c0_i32_0 = arith.constant 0 : i32
    %c0_i32_1 = arith.constant 0 : i32
    return %arg0, %c0_i32, %c0_i32_0 : i32, i32, i32
  }
  func.func @transform_8(%arg0: i32) -> (i32, i32, i32) {
    %c0_i32 = arith.constant 0 : i32
    %c0_i32_0 = arith.constant 0 : i32
    %c0_i32_1 = arith.constant 0 : i32
    return %arg0, %c0_i32, %c0_i32_0 : i32, i32, i32
  }
}

</mosaic_0001>

<llo_original>
// kernel: mlp_forward.3
$region0: #{mlp_forward.3}
  #allocation0 [shape = 'u32[]', space=smem, size = 0x4, offset = 0x4, fixed_abs, tag = 'smem constant byte address 0x4 - core index']
  #allocation1 [shape = 'u32[144,128]{1,0:T(1,128)}', space=vmem, size = 0x12000, scoped, tag = 'internal scratch']
  %s0 = inlined_call_operand.vmem [shape: f32[512,64], index: 0, kind: input, shape index: {}]
  %s1 = inlined_call_operand.vmem [shape: bf16[64,128], index: 1, kind: input, shape index: {}]
  %s2 = inlined_call_operand.vmem [shape: f32[1,128], index: 2, kind: input, shape index: {}]
  %s3 = inlined_call_operand.vmem [shape: f32[4,1,128], index: 3, kind: output, shape index: {0}]
  %s4 = inlined_call_operand.vmem [shape: f32[4,1,128], index: 4, kind: output, shape index: {1}]
  %5 = xla_tuple %s3, %s4
  %s6 = sld [smem:[#allocation0]]
  $region53: #{mlp_forward.3} parent=0
    _
  %s8 = ssub.s32 1, %s6
  %s9 = scalar_select 0, %s8, %s6
  loop: start=0, step=1, limit=6
  $region2: #{mlp_forward.3} parent=0 // loop_pre_header
    _
  $region3: #{mlp_forward.3} parent=0 // loop_header
    %s11 = sphi 0, %s15
    %p12 = scmp.ge.s32.totalorder %s11, 6
    %s21 = sphi 0, %s23
    %s24 = sphi 0, %s21
    %s25 = sphi 0, %s24
    %s41 = sphi 0, %s25
    %s45 = sphi 0, %s45
    %s47 = sphi 0, %s45
    %s48 = sphi 0, %s47
    %s62 = sphi 0, %s48
    %s66 = sphi 0, %s66
    %s68 = sphi 0, %s66
    %s69 = sphi 0, %s68
    %s83 = sphi 0, %s69
    %s89 = sphi 0, %s91
    %s92 = sphi 0, %s89
    %s93 = sphi 0, %s92
    %s109 = sphi 0, %s93
    %s115 = sphi 0, %s117
    %s118 = sphi 0, %s115
    %s119 = sphi 0, %s118
    %s135 = sphi 0, %s119
  $region4: #{mlp_forward.3} parent=0 // loop_header_branch
    %14 = sbr.rel (%p12) target = $region8
  $region5: #{mlp_forward.3} parent=0 // loop_body
    %s16 = ssub.s32 %s11, 1
    %s17 = ssub.s32 %s11, 2
    %s18 = sadd.s32 %s11, 1
    %s19 = ssub.s32 %s11, %s18
    %p20 = scmp.eq.s32.totalorder %s19, 0
    %s22 = sadd.s32 %s21, 1
    %s23 = scalar_select %p20, %s21, %s22
    %p26 = pneg %p20
    %p27 = scmp.eq.s32.totalorder %s11, 3
    %p28 = por %p26, %p27
    %p29 = scmp.ne.s32.totalorder %s21, %s24
    %p30 = scmp.eq.s32.totalorder %s11, 0
    %p31 = por %p29, %p30
    %p32 = scmp.ne.s32.totalorder %s21, %s24
    %p33 = scmp.eq.s32.totalorder %s16, 3
    %p34 = por %p32, %p33
    %p35 = scmp.ne.s32.totalorder %s24, %s25
    %p36 = scmp.eq.s32.totalorder %s16, 0
    %p37 = por %p35, %p36
    %p38 = scmp.ne.s32.totalorder %s24, %s25
    %p39 = scmp.eq.s32.totalorder %s17, 3
    %p40 = por %p38, %p39
    %p42 = scmp.ne.s32.totalorder %s25, %s41
    %p43 = scmp.eq.s32.totalorder %s17, 0
    %p44 = por %p42, %p43
    %s46 = sadd.s32 %s45, 1
    %p49 = scmp.eq.s32.totalorder %s11, 3
    %p50 = scmp.ne.s32.totalorder %s45, %s47
    %p51 = scmp.eq.s32.totalorder %s11, 0
    %p52 = por %p50, %p51
    %p53 = scmp.ne.s32.totalorder %s45, %s47
    %p54 = scmp.eq.s32.totalorder %s16, 3
    %p55 = por %p53, %p54
    %p56 = scmp.ne.s32.totalorder %s47, %s48
    %p57 = scmp.eq.s32.totalorder %s16, 0
    %p58 = por %p56, %p57
    %p59 = scmp.ne.s32.totalorder %s47, %s48
    %p60 = scmp.eq.s32.totalorder %s17, 3
    %p61 = por %p59, %p60
    %p63 = scmp.ne.s32.totalorder %s48, %s62
    %p64 = scmp.eq.s32.totalorder %s17, 0
    %p65 = por %p63, %p64
    %s67 = sadd.s32 %s66, 1
    %p70 = scmp.eq.s32.totalorder %s11, 3
    %p71 = scmp.ne.s32.totalorder %s66, %s68
    %p72 = scmp.eq.s32.totalorder %s11, 0
    %p73 = por %p71, %p72
    %p74 = scmp.ne.s32.totalorder %s66, %s68
    %p75 = scmp.eq.s32.totalorder %s16, 3
    %p76 = por %p74, %p75
    %p77 = scmp.ne.s32.totalorder %s68, %s69
    %p78 = scmp.eq.s32.totalorder %s16, 0
    %p79 = por %p77, %p78
    %p80 = scmp.ne.s32.totalorder %s68, %s69
    %p81 = scmp.eq.s32.totalorder %s17, 3
    %p82 = por %p80, %p81
    %p84 = scmp.ne.s32.totalorder %s69, %s83
    %p85 = scmp.eq.s32.totalorder %s17, 0
    %p86 = por %p84, %p85
    %s87 = ssub.s32 %s11, %s18
    %p88 = scmp.eq.s32.totalorder %s87, 0
    %s90 = sadd.s32 %s89, 1
    %s91 = scalar_select %p88, %s89, %s90
    %p94 = pneg %p88
    %p95 = scmp.eq.s32.totalorder %s11, 3
    %p96 = por %p94, %p95
    %p97 = scmp.ne.s32.totalorder %s89, %s92
    %p98 = scmp.eq.s32.totalorder %s11, 0
    %p99 = por %p97, %p98
    %p100 = scmp.ne.s32.totalorder %s89, %s92
    %p101 = scmp.eq.s32.totalorder %s16, 3
    %p102 = por %p100, %p101
    %p103 = scmp.ne.s32.totalorder %s92, %s93
    %p104 = scmp.eq.s32.totalorder %s16, 0
    %p105 = por %p103, %p104
    %p106 = scmp.ne.s32.totalorder %s92, %s93
    %p107 = scmp.eq.s32.totalorder %s17, 3
    %p108 = por %p106, %p107
    %p110 = scmp.ne.s32.totalorder %s93, %s109
    %p111 = scmp.eq.s32.totalorder %s17, 0
    %p112 = por %p110, %p111
    %s113 = ssub.s32 %s11, %s18
    %p114 = scmp.eq.s32.totalorder %s113, 0
    %s116 = sadd.s32 %s115, 1
    %s117 = scalar_select %p114, %s115, %s116
    %p120 = pneg %p114
    %p121 = scmp.eq.s32.totalorder %s11, 3
    %p122 = por %p120, %p121
    %p123 = scmp.ne.s32.totalorder %s115, %s118
    %p124 = scmp.eq.s32.totalorder %s11, 0
    %p125 = por %p123, %p124
    %p126 = scmp.ne.s32.totalorder %s115, %s118
    %p127 = scmp.eq.s32.totalorder %s16, 3
    %p128 = por %p126, %p127
    %p129 = scmp.ne.s32.totalorder %s118, %s119
    %p130 = scmp.eq.s32.totalorder %s16, 0
    %p131 = por %p129, %p130
    %p132 = scmp.ne.s32.totalorder %s118, %s119
    %p133 = scmp.eq.s32.totalorder %s17, 3
    %p134 = por %p132, %p133
    %p136 = scmp.ne.s32.totalorder %s119, %s135
    %p137 = scmp.eq.s32.totalorder %s17, 0
    %p138 = por %p136, %p137
    %p139 = scmp.le.s32.totalorder 1, %s11
    %p140 = scmp.lt.s32.totalorder %s11, 5
    %p141 = pnand %p139, %p140
    %p142 = pneg %p141
    // Predicated region
    $region9: #{mlp_forward.3} parent=5 // pred_check
      _
    $region10: #{mlp_forward.3} parent=5 // pred_check_branch
      %144 = sbr.rel (%p141) target = $region12
    $region11: #{mlp_forward.3} parent=5 // pred_region
      %s145 = ssub.s32 %s11, 1
      // Predicated region
      $region13: #{mlp_forward.3} parent=11 // pred_check
        %p146 = pneg %p58
      $region14: #{mlp_forward.3} parent=11 // pred_check_branch
        %148 = sbr.rel (%p146) target = $region16
      $region15: #{mlp_forward.3} parent=11 // pred_region
        _
      $region16: #{mlp_forward.3} parent=11 // pred_fallthru
        _
      // Predicated region
      $region17: #{mlp_forward.3} parent=11 // pred_check
        %p149 = pneg %p79
      $region18: #{mlp_forward.3} parent=11 // pred_check_branch
        %151 = sbr.rel (%p149) target = $region20
      $region19: #{mlp_forward.3} parent=11 // pred_region
        _
      $region20: #{mlp_forward.3} parent=11 // pred_fallthru
        _
    $region12: #{mlp_forward.3} parent=5 // pred_fallthru
      _
    %p152 = scmp.lt.s32.totalorder %s11, 4
    // Predicated region
    $region21: #{mlp_forward.3} parent=5 // pred_check
      %p153 = pneg %p152
    $region22: #{mlp_forward.3} parent=5 // pred_check_branch
      %155 = sbr.rel (%p153) target = $region24
    $region23: #{mlp_forward.3} parent=5 // pred_region
      // Predicated region
      $region25: #{mlp_forward.3} parent=23 // pred_check
        %p156 = pneg %p31
      $region26: #{mlp_forward.3} parent=23 // pred_check_branch
        %158 = sbr.rel (%p156) target = $region28
      $region27: #{mlp_forward.3} parent=23 // pred_region
        %s159 = smul.u32 16, %s11
        %p160 = scmp.lt.s32.totalorder %s159, 63
        %s161 = scalar_select %p160, %s159, 63
        %s162 = smul.addr %s161, 8
        %s163 = scalar_lea.vmem %s0, %s162
        %s164 = smul.u32 16, %s11
      $region28: #{mlp_forward.3} parent=23 // pred_fallthru
        _
    $region24: #{mlp_forward.3} parent=5 // pred_fallthru
      _
    %p165 = scmp.le.s32.totalorder 1, %s11
    %p166 = scmp.lt.s32.totalorder %s11, 5
    %p167 = pnand %p165, %p166
    %p168 = pneg %p167
    // Predicated region
    $region29: #{mlp_forward.3} parent=5 // pred_check
      _
    $region30: #{mlp_forward.3} parent=5 // pred_check_branch
      %170 = sbr.rel (%p167) target = $region32
    $region31: #{mlp_forward.3} parent=5 // pred_region
      %s171 = ssub.s32 %s11, 1
      %s172 = smul.u32 16, %s16
      %p173 = scmp.lt.s32.totalorder %s172, 63
      %s174 = scalar_select %p173, %s172, 63
      %s175 = smul.addr %s174, 8
      %s176 = scalar_lea.vmem %s0, %s175
      %p177 = pneg %p37
      %p178 = pneg %p34
      %p179 = pneg %p58
      %p180 = pneg %p55
      %p181 = pneg %p79
      %p182 = pneg %p76
      %p183 = pneg %p105
      %p184 = pneg %p102
      %p185 = scmp.lt.s32.totalorder %s16, 3
      %s186 = scalar_select %p185, %s16, 3
      %s187 = scalar_lea.vmem %s3, %s186
      %p188 = pneg %p131
      %p189 = pneg %p128
      %p190 = scmp.lt.s32.totalorder %s16, 3
      %s191 = scalar_select %p190, %s16, 3
      %s192 = scalar_lea.vmem %s4, %s191
      %s193 = smul.u32 16, %s16
      %p194 = scmp.lt.s32.totalorder %s193, 63
      %s195 = scalar_select %p194, %s193, 63
      %s196 = smul.addr %s195, 8
      %s197 = scalar_lea.vmem %s0, %s196
      %s198 = smul.u32 16, %s16
      %p199 = scmp.lt.s32.totalorder %s16, 3
      %s200 = scalar_select %p199, %s16, 3
      %s201 = scalar_lea.vmem %s3, %s200
      %p202 = scmp.lt.s32.totalorder %s16, 3
      %s203 = scalar_select %p202, %s16, 3
      %s204 = scalar_lea.vmem %s4, %s203
      %v206 = vld [vmem:[%s197] sm:$0xff]
      %v207 = vld [vmem:[%s197 + $0x8] sm:$0xff]
      %v208 = vld [vmem:[%s197 + $0x10] sm:$0xff]
      %v209 = vld [vmem:[%s197 + $0x18] sm:$0xff]
      %v210 = vld [vmem:[%s197 + $0x20] sm:$0xff]
      %v211 = vld [vmem:[%s197 + $0x28] sm:$0xff]
      %v212 = vld [vmem:[%s197 + $0x30] sm:$0xff]
      %v213 = vld [vmem:[%s197 + $0x38] sm:$0xff]
      %v214 = vld [vmem:[%s197 + $0x40] sm:$0xff]
      %v215 = vld [vmem:[%s197 + $0x48] sm:$0xff]
      %v216 = vld [vmem:[%s197 + $0x50] sm:$0xff]
      %v217 = vld [vmem:[%s197 + $0x58] sm:$0xff]
      %v218 = vld [vmem:[%s197 + $0x60] sm:$0xff]
      %v219 = vld [vmem:[%s197 + $0x68] sm:$0xff]
      %v220 = vld [vmem:[%s197 + $0x70] sm:$0xff]
      %v221 = vld [vmem:[%s197 + $0x78] sm:$0xff]
      %v222 = vpack.c.bf16 %v207, %v206
      %v223 = vpack.c.bf16 %v209, %v208
      %v224 = vpack.c.bf16 %v211, %v210
      %v225 = vpack.c.bf16 %v213, %v212
      %v226 = vpack.c.bf16 %v215, %v214
      %v227 = vpack.c.bf16 %v217, %v216
      %v228 = vpack.c.bf16 %v219, %v218
      %v229 = vpack.c.bf16 %v221, %v220
      %v230 = vld [vmem:[%s1] sm:$0xf]
      %v231 = vld [vmem:[%s1 + $0x4] sm:$0xf]
      %v232 = vld [vmem:[%s1 + $0x8] sm:$0xf]
      %v233 = vld [vmem:[%s1 + $0xc] sm:$0xf]
      %v234 = vld [vmem:[%s1 + $0x10] sm:$0xf]
      %v235 = vld [vmem:[%s1 + $0x14] sm:$0xf]
      %v236 = vld [vmem:[%s1 + $0x18] sm:$0xf]
      %v237 = vld [vmem:[%s1 + $0x1c] sm:$0xf]
      %v238 = vld [vmem:[%s2] sm:$0x1]
      %v240 = vlaneseq
      %v241 = vshrl.u32 %v240, 7
      %v242 = vsub.s32 0, %v241
      %v243 = vrot.slane %v238, %v242
      %v253 = vunpack.c.l.b16 %v230
      %v254 = vunpack.c.l.b16 %v231
      %v255 = vunpack.c.l.b16 %v232
      %v256 = vunpack.c.l.b16 %v233
      %v257 = vunpack.c.l.b16 %v234
      %v258 = vunpack.c.l.b16 %v235
      %v259 = vunpack.c.l.b16 %v236
      %v260 = vunpack.c.l.b16 %v237
      %v261 = vpack.c.b16 %v254, %v253
      %v262 = vpack.c.b16 %v256, %v255
      %v263 = vpack.c.b16 %v258, %v257
      %v264 = vpack.c.b16 %v260, %v259
      %vm269 = vcmask 523264
      %v271 = vsel %vm269, %v222, 0
      %v274 = vsel %vm269, %v223, 0
      %v277 = vsel %vm269, %v224, 0
      %v280 = vsel %vm269, %v225, 0
      %v283 = vsel %vm269, %v226, 0
      %v286 = vsel %vm269, %v227, 0
      %v289 = vsel %vm269, %v228, 0
      %v292 = vsel %vm269, %v229, 0
      %294 = vmatprep.subr.bf16.mxu0 0
      %295 = vmatpush1.bf16.msra.mxu0 %v261
      %296 = vmatprep.subr.bf16.mxu0 0
      %297 = vmatpush1.bf16.msra.mxu0 %v262
      %298 = vmatprep.subr.bf16.mxu0 0
      %299 = vmatpush1.bf16.msra.mxu0 %v263
      %300 = vmatprep.subr.bf16.mxu0 0
      %301 = vmatpush1.bf16.msra.mxu0 %v264
      %302 = vmatprep.subr.bf16.mxu0 0
      %303 = vmatpush1.bf16.msra.mxu0 0
      %304 = vmatprep.subr.bf16.mxu0 0
      %305 = vmatpush1.bf16.msra.mxu0 0
      %306 = vmatprep.subr.bf16.mxu0 0
      %307 = vmatpush1.bf16.msra.mxu0 0
      %308 = vmatprep.subr.bf16.mxu0 0
      %309 = vmatpush1.bf16.msra.mxu0 0
      %310 = vmatprep.subr.bf16.mxu0 0
      %311 = vmatpush1.bf16.msra.mxu0 0
      %312 = vmatprep.subr.bf16.mxu0 0
      %313 = vmatpush1.bf16.msra.mxu0 0
      %314 = vmatprep.subr.bf16.mxu0 0
      %315 = vmatpush1.bf16.msra.mxu0 0
      %316 = vmatprep.subr.bf16.mxu0 0
      %317 = vmatpush1.bf16.msra.mxu0 0
      %318 = vmatprep.subr.bf16.mxu0 0
      %319 = vmatpush1.bf16.msra.mxu0 0
      %320 = vmatprep.subr.bf16.mxu0 0
      %321 = vmatpush1.bf16.msra.mxu0 0
      %322 = vmatprep.subr.bf16.mxu0 0
      %323 = vmatpush1.bf16.msra.mxu0 0
      %324 = vmatprep.subr.bf16.mxu0 0
      %325 = vmatpush1.bf16.msra.mxu0 0
      %326 = vmatprep.mubr.bf16.mxu0 0
      %327 = vmatmul.mubr.bf16.gmra.mrb[0].mxu0 %v271
      %v328 = vpop.f32.mrb[0].mxu0
      %v329 = vadd.f32 %v243, %v328
      %v330 = vpop.f32.mrb[0].mxu0
      %v331 = vpop.f32.mrb[0].mxu0
      %v332 = vadd.f32 %v243, %v331
      %v333 = vpop.f32.mrb[0].mxu0
      %334 = vmatprep.mubr.bf16.mxu0 0
      %335 = vmatmul.mubr.bf16.gmra.mrb[0].mxu0 %v274
      %v336 = vpop.f32.mrb[0].mxu0
      %v337 = vadd.f32 %v243, %v336
      %v338 = vpop.f32.mrb[0].mxu0
      %v339 = vpop.f32.mrb[0].mxu0
      %v340 = vadd.f32 %v243, %v339
      %v341 = vpop.f32.mrb[0].mxu0
      %342 = vmatprep.mubr.bf16.mxu0 0
      %343 = vmatmul.mubr.bf16.gmra.mrb[0].mxu0 %v277
      %v344 = vpop.f32.mrb[0].mxu0
      %v345 = vadd.f32 %v243, %v344
      %v346 = vpop.f32.mrb[0].mxu0
      %v347 = vpop.f32.mrb[0].mxu0
      %v348 = vadd.f32 %v243, %v347
      %v349 = vpop.f32.mrb[0].mxu0
      %350 = vmatprep.mubr.bf16.mxu0 0
      %351 = vmatmul.mubr.bf16.gmra.mrb[0].mxu0 %v280
      %v352 = vpop.f32.mrb[0].mxu0
      %v353 = vadd.f32 %v243, %v352
      %v354 = vpop.f32.mrb[0].mxu0
      %v355 = vpop.f32.mrb[0].mxu0
      %v356 = vadd.f32 %v243, %v355
      %v357 = vpop.f32.mrb[0].mxu0
      %358 = vmatprep.mubr.bf16.mxu0 0
      %359 = vmatmul.mubr.bf16.gmra.mrb[0].mxu0 %v283
      %v360 = vpop.f32.mrb[0].mxu0
      %v361 = vadd.f32 %v243, %v360
      %v362 = vpop.f32.mrb[0].mxu0
      %v363 = vpop.f32.mrb[0].mxu0
      %v364 = vadd.f32 %v243, %v363
      %v365 = vpop.f32.mrb[0].mxu0
      %366 = vmatprep.mubr.bf16.mxu0 0
      %367 = vmatmul.mubr.bf16.gmra.mrb[0].mxu0 %v286
      %v368 = vpop.f32.mrb[0].mxu0
      %v369 = vadd.f32 %v243, %v368
      %v370 = vpop.f32.mrb[0].mxu0
      %v371 = vpop.f32.mrb[0].mxu0
      %v372 = vadd.f32 %v243, %v371
      %v373 = vpop.f32.mrb[0].mxu0
      %374 = vmatprep.mubr.bf16.mxu0 0
      %375 = vmatmul.mubr.bf16.gmra.mrb[0].mxu0 %v289
      %v376 = vpop.f32.mrb[0].mxu0
      %v377 = vadd.f32 %v243, %v376
      %v378 = vpop.f32.mrb[0].mxu0
      %v379 = vpop.f32.mrb[0].mxu0
      %v380 = vadd.f32 %v243, %v379
      %v381 = vpop.f32.mrb[0].mxu0
      %382 = vmatprep.mubr.bf16.mxu0 0
      %383 = vmatmul.mubr.bf16.gmra.mrb[0].mxu0 %v292
      %v384 = vpop.f32.mrb[0].mxu0
      %v385 = vadd.f32 %v243, %v384
      %v386 = vpop.f32.mrb[0].mxu0
      %v387 = vpop.f32.mrb[0].mxu0
      %v388 = vadd.f32 %v243, %v387
      %v389 = vpop.f32.mrb[0].mxu0
      %390 = vdwg.mxu0
      %v391 = vadd.f32 %v329, %v332
      %v392 = vadd.f32 %v391, %v337
      %v393 = vadd.f32 %v392, %v340
      %v394 = vadd.f32 %v393, %v345
      %v395 = vadd.f32 %v394, %v348
      %v396 = vadd.f32 %v395, %v353
      %v397 = vadd.f32 %v396, %v356
      %v398 = vadd.f32 %v397, %v361
      %v399 = vadd.f32 %v398, %v364
      %v400 = vadd.f32 %v399, %v369
      %v401 = vadd.f32 %v400, %v372
      %v402 = vadd.f32 %v401, %v377
      %v403 = vadd.f32 %v402, %v380
      %v404 = vadd.f32 %v403, %v385
      %v405 = vadd.f32 %v404, %v388
      %v406 = vrot.slane %v405, 4
      %v407 = vadd.f32 %v405, %v406
      %v408 = vrot.slane %v407, 2
      %v409 = vadd.f32 %v407, %v408
      %v410 = vrot.slane %v409, 1
      %v411 = vadd.f32 %v409, %v410
      %v412 = vmul.f32 %v329, %v329
      %v413 = vmul.f32 %v332, %v332
      %v414 = vmul.f32 %v337, %v337
      %v415 = vmul.f32 %v340, %v340
      %v416 = vmul.f32 %v345, %v345
      %v417 = vmul.f32 %v348, %v348
      %v418 = vmul.f32 %v353, %v353
      %v419 = vmul.f32 %v356, %v356
      %v420 = vmul.f32 %v361, %v361
      %v421 = vmul.f32 %v364, %v364
      %v422 = vmul.f32 %v369, %v369
      %v423 = vmul.f32 %v372, %v372
      %v424 = vmul.f32 %v377, %v377
      %v425 = vmul.f32 %v380, %v380
      %v426 = vmul.f32 %v385, %v385
      %v427 = vmul.f32 %v388, %v388
      %v428 = vadd.f32 %v412, %v413
      %v429 = vadd.f32 %v428, %v414
      %v430 = vadd.f32 %v429, %v415
      %v431 = vadd.f32 %v430, %v416
      %v432 = vadd.f32 %v431, %v417
      %v433 = vadd.f32 %v432, %v418
      %v434 = vadd.f32 %v433, %v419
      %v435 = vadd.f32 %v434, %v420
      %v436 = vadd.f32 %v435, %v421
      %v437 = vadd.f32 %v436, %v422
      %v438 = vadd.f32 %v437, %v423
      %v439 = vadd.f32 %v438, %v424
      %v440 = vadd.f32 %v439, %v425
      %v441 = vadd.f32 %v440, %v426
      %v442 = vadd.f32 %v441, %v427
      %v443 = vrot.slane %v442, 4
      %v444 = vadd.f32 %v442, %v443
      %v445 = vrot.slane %v444, 2
      %v446 = vadd.f32 %v444, %v445
      %v447 = vrot.slane %v446, 1
      %v448 = vadd.f32 %v446, %v447
      %449 = vst [vmem:[%s201] sm:$0x1] %v411
      %450 = vst [vmem:[%s204] sm:$0x1] %v448
      %p451 = scmp.lt.s32.totalorder %s16, 3
      %s452 = scalar_select %p451, %s16, 3
      %s453 = scalar_lea.vmem %s3, %s452
      %p454 = scmp.lt.s32.totalorder %s16, 3
      %s455 = scalar_select %p454, %s16, 3
      %s456 = scalar_lea.vmem %s4, %s455
      // Predicated region
      $region33: #{mlp_forward.3} parent=31 // pred_check
        %p457 = pneg %p102
      $region34: #{mlp_forward.3} parent=31 // pred_check_branch
        %459 = sbr.rel (%p457) target = $region36
      $region35: #{mlp_forward.3} parent=31 // pred_region
        _
      $region36: #{mlp_forward.3} parent=31 // pred_fallthru
        _
      // Predicated region
      $region37: #{mlp_forward.3} parent=31 // pred_check
        %p460 = pneg %p128
      $region38: #{mlp_forward.3} parent=31 // pred_check_branch
        %462 = sbr.rel (%p460) target = $region40
      $region39: #{mlp_forward.3} parent=31 // pred_region
        _
      $region40: #{mlp_forward.3} parent=31 // pred_fallthru
        _
    $region32: #{mlp_forward.3} parent=5 // pred_fallthru
      _
    %p463 = scmp.le.s32.totalorder 2, %s11
    // Predicated region
    $region41: #{mlp_forward.3} parent=5 // pred_check
      %p464 = pneg %p463
    $region42: #{mlp_forward.3} parent=5 // pred_check_branch
      %466 = sbr.rel (%p464) target = $region44
    $region43: #{mlp_forward.3} parent=5 // pred_region
      %s467 = ssub.s32 %s11, 2
      // Predicated region
      $region45: #{mlp_forward.3} parent=43 // pred_check
        %p468 = pneg %p108
      $region46: #{mlp_forward.3} parent=43 // pred_check_branch
        %470 = sbr.rel (%p468) target = $region48
      $region47: #{mlp_forward.3} parent=43 // pred_region
        %p471 = scmp.lt.s32.totalorder %s17, 3
        %s472 = scalar_select %p471, %s17, 3
        %s473 = scalar_lea.vmem %s3, %s472
      $region48: #{mlp_forward.3} parent=43 // pred_fallthru
        _
      // Predicated region
      $region49: #{mlp_forward.3} parent=43 // pred_check
        %p474 = pneg %p134
      $region50: #{mlp_forward.3} parent=43 // pred_check_branch
        %476 = sbr.rel (%p474) target = $region52
      $region51: #{mlp_forward.3} parent=43 // pred_region
        %p477 = scmp.lt.s32.totalorder %s17, 3
        %s478 = scalar_select %p477, %s17, 3
        %s479 = scalar_lea.vmem %s4, %s478
      $region52: #{mlp_forward.3} parent=43 // pred_fallthru
        _
    $region44: #{mlp_forward.3} parent=5 // pred_fallthru
      _
  $region6: #{mlp_forward.3} parent=0 // loop_footer
    %s15 = sadd.s32 1, %s11
  $region7: #{mlp_forward.3} parent=0 // loop_footer_branch
    %10 = sbr.rel target = $region3
  $region8: #{mlp_forward.3} parent=0 // loop_exit
    _

// kernel: mlp_forward.4
$region0: #{mlp_forward.4}
  #allocation0 [shape = 'u32[]', space=smem, size = 0x4, offset = 0x4, fixed_abs, tag = 'smem constant byte address 0x4 - core index']
  #allocation1 [shape = 'u32[144,128]{1,0:T(1,128)}', space=vmem, size = 0x12000, scoped, tag = 'internal scratch']
  %s0 = inlined_call_operand.vmem [shape: f32[512,64], index: 0, kind: input, shape index: {}]
  %s1 = inlined_call_operand.vmem [shape: bf16[64,128], index: 1, kind: input, shape index: {}]
  %s2 = inlined_call_operand.vmem [shape: f32[1,128], index: 2, kind: input, shape index: {}]
  %s3 = inlined_call_operand.vmem [shape: f32[1,128], index: 3, kind: input, shape index: {}]
  %s4 = inlined_call_operand.vmem [shape: f32[1,128], index: 4, kind: input, shape index: {}]
  %s5 = inlined_call_operand.vmem [shape: bf16[128,128], index: 5, kind: input, shape index: {}]
  %s6 = inlined_call_operand.vmem [shape: f32[1,128], index: 6, kind: input, shape index: {}]
  %s7 = inlined_call_operand.vmem [shape: f32[4,1,128], index: 7, kind: output, shape index: {0}]
  %s8 = inlined_call_operand.vmem [shape: f32[4,1,128], index: 8, kind: output, shape index: {1}]
  %9 = xla_tuple %s7, %s8
  %s10 = sld [smem:[#allocation0]]
  $region69: #{mlp_forward.4} parent=0
    _
  %s12 = ssub.s32 1, %s10
  %s13 = scalar_select 0, %s12, %s10
  loop: start=0, step=1, limit=6
  $region2: #{mlp_forward.4} parent=0 // loop_pre_header
    _
  $region3: #{mlp_forward.4} parent=0 // loop_header
    %s15 = sphi 0, %s19
    %p16 = scmp.ge.s32.totalorder %s15, 6
    %s25 = sphi 0, %s27
    %s28 = sphi 0, %s25
    %s29 = sphi 0, %s28
    %s45 = sphi 0, %s29
    %s49 = sphi 0, %s49
    %s51 = sphi 0, %s49
    %s52 = sphi 0, %s51
    %s66 = sphi 0, %s52
    %s70 = sphi 0, %s70
    %s72 = sphi 0, %s70
    %s73 = sphi 0, %s72
    %s87 = sphi 0, %s73
    %s91 = sphi 0, %s91
    %s93 = sphi 0, %s91
    %s94 = sphi 0, %s93
    %s108 = sphi 0, %s94
    %s112 = sphi 0, %s112
    %s114 = sphi 0, %s112
    %s115 = sphi 0, %s114
    %s129 = sphi 0, %s115
    %s133 = sphi 0, %s133
    %s135 = sphi 0, %s133
    %s136 = sphi 0, %s135
    %s150 = sphi 0, %s136
    %s154 = sphi 0, %s154
    %s156 = sphi 0, %s154
    %s157 = sphi 0, %s156
    %s171 = sphi 0, %s157
    %s177 = sphi 0, %s179
    %s180 = sphi 0, %s177
    %s181 = sphi 0, %s180
    %s197 = sphi 0, %s181
    %s203 = sphi 0, %s205
    %s206 = sphi 0, %s203
    %s207 = sphi 0, %s206
    %s223 = sphi 0, %s207
  $region4: #{mlp_forward.4} parent=0 // loop_header_branch
    %18 = sbr.rel (%p16) target = $region8
  $region5: #{mlp_forward.4} parent=0 // loop_body
    %s20 = ssub.s32 %s15, 1
    %s21 = ssub.s32 %s15, 2
    %s22 = sadd.s32 %s15, 1
    %s23 = ssub.s32 %s15, %s22
    %p24 = scmp.eq.s32.totalorder %s23, 0
    %s26 = sadd.s32 %s25, 1
    %s27 = scalar_select %p24, %s25, %s26
    %p30 = pneg %p24
    %p31 = scmp.eq.s32.totalorder %s15, 3
    %p32 = por %p30, %p31
    %p33 = scmp.ne.s32.totalorder %s25, %s28
    %p34 = scmp.eq.s32.totalorder %s15, 0
    %p35 = por %p33, %p34
    %p36 = scmp.ne.s32.totalorder %s25, %s28
    %p37 = scmp.eq.s32.totalorder %s20, 3
    %p38 = por %p36, %p37
    %p39 = scmp.ne.s32.totalorder %s28, %s29
    %p40 = scmp.eq.s32.totalorder %s20, 0
    %p41 = por %p39, %p40
    %p42 = scmp.ne.s32.totalorder %s28, %s29
    %p43 = scmp.eq.s32.totalorder %s21, 3
    %p44 = por %p42, %p43
    %p46 = scmp.ne.s32.totalorder %s29, %s45
    %p47 = scmp.eq.s32.totalorder %s21, 0
    %p48 = por %p46, %p47
    %s50 = sadd.s32 %s49, 1
    %p53 = scmp.eq.s32.totalorder %s15, 3
    %p54 = scmp.ne.s32.totalorder %s49, %s51
    %p55 = scmp.eq.s32.totalorder %s15, 0
    %p56 = por %p54, %p55
    %p57 = scmp.ne.s32.totalorder %s49, %s51
    %p58 = scmp.eq.s32.totalorder %s20, 3
    %p59 = por %p57, %p58
    %p60 = scmp.ne.s32.totalorder %s51, %s52
    %p61 = scmp.eq.s32.totalorder %s20, 0
    %p62 = por %p60, %p61
    %p63 = scmp.ne.s32.totalorder %s51, %s52
    %p64 = scmp.eq.s32.totalorder %s21, 3
    %p65 = por %p63, %p64
    %p67 = scmp.ne.s32.totalorder %s52, %s66
    %p68 = scmp.eq.s32.totalorder %s21, 0
    %p69 = por %p67, %p68
    %s71 = sadd.s32 %s70, 1
    %p74 = scmp.eq.s32.totalorder %s15, 3
    %p75 = scmp.ne.s32.totalorder %s70, %s72
    %p76 = scmp.eq.s32.totalorder %s15, 0
    %p77 = por %p75, %p76
    %p78 = scmp.ne.s32.totalorder %s70, %s72
    %p79 = scmp.eq.s32.totalorder %s20, 3
    %p80 = por %p78, %p79
    %p81 = scmp.ne.s32.totalorder %s72, %s73
    %p82 = scmp.eq.s32.totalorder %s20, 0
    %p83 = por %p81, %p82
    %p84 = scmp.ne.s32.totalorder %s72, %s73
    %p85 = scmp.eq.s32.totalorder %s21, 3
    %p86 = por %p84, %p85
    %p88 = scmp.ne.s32.totalorder %s73, %s87
    %p89 = scmp.eq.s32.totalorder %s21, 0
    %p90 = por %p88, %p89
    %s92 = sadd.s32 %s91, 1
    %p95 = scmp.eq.s32.totalorder %s15, 3
    %p96 = scmp.ne.s32.totalorder %s91, %s93
    %p97 = scmp.eq.s32.totalorder %s15, 0
    %p98 = por %p96, %p97
    %p99 = scmp.ne.s32.totalorder %s91, %s93
    %p100 = scmp.eq.s32.totalorder %s20, 3
    %p101 = por %p99, %p100
    %p102 = scmp.ne.s32.totalorder %s93, %s94
    %p103 = scmp.eq.s32.totalorder %s20, 0
    %p104 = por %p102, %p103
    %p105 = scmp.ne.s32.totalorder %s93, %s94
    %p106 = scmp.eq.s32.totalorder %s21, 3
    %p107 = por %p105, %p106
    %p109 = scmp.ne.s32.totalorder %s94, %s108
    %p110 = scmp.eq.s32.totalorder %s21, 0
    %p111 = por %p109, %p110
    %s113 = sadd.s32 %s112, 1
    %p116 = scmp.eq.s32.totalorder %s15, 3
    %p117 = scmp.ne.s32.totalorder %s112, %s114
    %p118 = scmp.eq.s32.totalorder %s15, 0
    %p119 = por %p117, %p118
    %p120 = scmp.ne.s32.totalorder %s112, %s114
    %p121 = scmp.eq.s32.totalorder %s20, 3
    %p122 = por %p120, %p121
    %p123 = scmp.ne.s32.totalorder %s114, %s115
    %p124 = scmp.eq.s32.totalorder %s20, 0
    %p125 = por %p123, %p124
    %p126 = scmp.ne.s32.totalorder %s114, %s115
    %p127 = scmp.eq.s32.totalorder %s21, 3
    %p128 = por %p126, %p127
    %p130 = scmp.ne.s32.totalorder %s115, %s129
    %p131 = scmp.eq.s32.totalorder %s21, 0
    %p132 = por %p130, %p131
    %s134 = sadd.s32 %s133, 1
    %p137 = scmp.eq.s32.totalorder %s15, 3
    %p138 = scmp.ne.s32.totalorder %s133, %s135
    %p139 = scmp.eq.s32.totalorder %s15, 0
    %p140 = por %p138, %p139
    %p141 = scmp.ne.s32.totalorder %s133, %s135
    %p142 = scmp.eq.s32.totalorder %s20, 3
    %p143 = por %p141, %p142
    %p144 = scmp.ne.s32.totalorder %s135, %s136
    %p145 = scmp.eq.s32.totalorder %s20, 0
    %p146 = por %p144, %p145
    %p147 = scmp.ne.s32.totalorder %s135, %s136
    %p148 = scmp.eq.s32.totalorder %s21, 3
    %p149 = por %p147, %p148
    %p151 = scmp.ne.s32.totalorder %s136, %s150
    %p152 = scmp.eq.s32.totalorder %s21, 0
    %p153 = por %p151, %p152
    %s155 = sadd.s32 %s154, 1
    %p158 = scmp.eq.s32.totalorder %s15, 3
    %p159 = scmp.ne.s32.totalorder %s154, %s156
    %p160 = scmp.eq.s32.totalorder %s15, 0
    %p161 = por %p159, %p160
    %p162 = scmp.ne.s32.totalorder %s154, %s156
    %p163 = scmp.eq.s32.totalorder %s20, 3
    %p164 = por %p162, %p163
    %p165 = scmp.ne.s32.totalorder %s156, %s157
    %p166 = scmp.eq.s32.totalorder %s20, 0
    %p167 = por %p165, %p166
    %p168 = scmp.ne.s32.totalorder %s156, %s157
    %p169 = scmp.eq.s32.totalorder %s21, 3
    %p170 = por %p168, %p169
    %p172 = scmp.ne.s32.totalorder %s157, %s171
    %p173 = scmp.eq.s32.totalorder %s21, 0
    %p174 = por %p172, %p173
    %s175 = ssub.s32 %s15, %s22
    %p176 = scmp.eq.s32.totalorder %s175, 0
    %s178 = sadd.s32 %s177, 1
    %s179 = scalar_select %p176, %s177, %s178
    %p182 = pneg %p176
    %p183 = scmp.eq.s32.totalorder %s15, 3
    %p184 = por %p182, %p183
    %p185 = scmp.ne.s32.totalorder %s177, %s180
    %p186 = scmp.eq.s32.totalorder %s15, 0
    %p187 = por %p185, %p186
    %p188 = scmp.ne.s32.totalorder %s177, %s180
    %p189 = scmp.eq.s32.totalorder %s20, 3
    %p190 = por %p188, %p189
    %p191 = scmp.ne.s32.totalorder %s180, %s181
    %p192 = scmp.eq.s32.totalorder %s20, 0
    %p193 = por %p191, %p192
    %p194 = scmp.ne.s32.totalorder %s180, %s181
    %p195 = scmp.eq.s32.totalorder %s21, 3
    %p196 = por %p194, %p195
    %p198 = scmp.ne.s32.totalorder %s181, %s197
    %p199 = scmp.eq.s32.totalorder %s21, 0
    %p200 = por %p198, %p199
    %s201 = ssub.s32 %s15, %s22
    %p202 = scmp.eq.s32.totalorder %s201, 0
    %s204 = sadd.s32 %s203, 1
    %s205 = scalar_select %p202, %s203, %s204
    %p208 = pneg %p202
    %p209 = scmp.eq.s32.totalorder %s15, 3
    %p210 = por %p208, %p209
    %p211 = scmp.ne.s32.totalorder %s203, %s206
    %p212 = scmp.eq.s32.totalorder %s15, 0
    %p213 = por %p211, %p212
    %p214 = scmp.ne.s32.totalorder %s203, %s206
    %p215 = scmp.eq.s32.totalorder %s20, 3
    %p216 = por %p214, %p215
    %p217 = scmp.ne.s32.totalorder %s206, %s207
    %p218 = scmp.eq.s32.totalorder %s20, 0
    %p219 = por %p217, %p218
    %p220 = scmp.ne.s32.totalorder %s206, %s207
    %p221 = scmp.eq.s32.totalorder %s21, 3
    %p222 = por %p220, %p221
    %p224 = scmp.ne.s32.totalorder %s207, %s223
    %p225 = scmp.eq.s32.totalorder %s21, 0
    %p226 = por %p224, %p225
    %p227 = scmp.le.s32.totalorder 1, %s15
    %p228 = scmp.lt.s32.totalorder %s15, 5
    %p229 = pnand %p227, %p228
    %p230 = pneg %p229
    // Predicated region
    $region9: #{mlp_forward.4} parent=5 // pred_check
      _
    $region10: #{mlp_forward.4} parent=5 // pred_check_branch
      %232 = sbr.rel (%p229) target = $region12
    $region11: #{mlp_forward.4} parent=5 // pred_region
      %s233 = ssub.s32 %s15, 1
      // Predicated region
      $region13: #{mlp_forward.4} parent=11 // pred_check
        %p234 = pneg %p62
      $region14: #{mlp_forward.4} parent=11 // pred_check_branch
        %236 = sbr.rel (%p234) target = $region16
      $region15: #{mlp_forward.4} parent=11 // pred_region
        _
      $region16: #{mlp_forward.4} parent=11 // pred_fallthru
        _
      // Predicated region
      $region17: #{mlp_forward.4} parent=11 // pred_check
        %p237 = pneg %p83
      $region18: #{mlp_forward.4} parent=11 // pred_check_branch
        %239 = sbr.rel (%p237) target = $region20
      $region19: #{mlp_forward.4} parent=11 // pred_region
        _
      $region20: #{mlp_forward.4} parent=11 // pred_fallthru
        _
      // Predicated region
      $region21: #{mlp_forward.4} parent=11 // pred_check
        %p240 = pneg %p104
      $region22: #{mlp_forward.4} parent=11 // pred_check_branch
        %242 = sbr.rel (%p240) target = $region24
      $region23: #{mlp_forward.4} parent=11 // pred_region
        _
      $region24: #{mlp_forward.4} parent=11 // pred_fallthru
        _
      // Predicated region
      $region25: #{mlp_forward.4} parent=11 // pred_check
        %p243 = pneg %p125
      $region26: #{mlp_forward.4} parent=11 // pred_check_branch
        %245 = sbr.rel (%p243) target = $region28
      $region27: #{mlp_forward.4} parent=11 // pred_region
        _
      $region28: #{mlp_forward.4} parent=11 // pred_fallthru
        _
      // Predicated region
      $region29: #{mlp_forward.4} parent=11 // pred_check
        %p246 = pneg %p146
      $region30: #{mlp_forward.4} parent=11 // pred_check_branch
        %248 = sbr.rel (%p246) target = $region32
      $region31: #{mlp_forward.4} parent=11 // pred_region
        _
      $region32: #{mlp_forward.4} parent=11 // pred_fallthru
        _
      // Predicated region
      $region33: #{mlp_forward.4} parent=11 // pred_check
        %p249 = pneg %p167
      $region34: #{mlp_forward.4} parent=11 // pred_check_branch
        %251 = sbr.rel (%p249) target = $region36
      $region35: #{mlp_forward.4} parent=11 // pred_region
        _
      $region36: #{mlp_forward.4} parent=11 // pred_fallthru
        _
    $region12: #{mlp_forward.4} parent=5 // pred_fallthru
      _
    %p252 = scmp.lt.s32.totalorder %s15, 4
    // Predicated region
    $region37: #{mlp_forward.4} parent=5 // pred_check
      %p253 = pneg %p252
    $region38: #{mlp_forward.4} parent=5 // pred_check_branch
      %255 = sbr.rel (%p253) target = $region40
    $region39: #{mlp_forward.4} parent=5 // pred_region
      // Predicated region
      $region41: #{mlp_forward.4} parent=39 // pred_check
        %p256 = pneg %p35
      $region42: #{mlp_forward.4} parent=39 // pred_check_branch
        %258 = sbr.rel (%p256) target = $region44
      $region43: #{mlp_forward.4} parent=39 // pred_region
        %s259 = smul.u32 16, %s15
        %p260 = scmp.lt.s32.totalorder %s259, 63
        %s261 = scalar_select %p260, %s259, 63
        %s262 = smul.addr %s261, 8
        %s263 = scalar_lea.vmem %s0, %s262
        %s264 = smul.u32 16, %s15
      $region44: #{mlp_forward.4} parent=39 // pred_fallthru
        _
    $region40: #{mlp_forward.4} parent=5 // pred_fallthru
      _
    %p265 = scmp.le.s32.totalorder 1, %s15
    %p266 = scmp.lt.s32.totalorder %s15, 5
    %p267 = pnand %p265, %p266
    %p268 = pneg %p267
    // Predicated region
    $region45: #{mlp_forward.4} parent=5 // pred_check
      _
    $region46: #{mlp_forward.4} parent=5 // pred_check_branch
      %270 = sbr.rel (%p267) target = $region48
    $region47: #{mlp_forward.4} parent=5 // pred_region
      %s271 = ssub.s32 %s15, 1
      %s272 = smul.u32 16, %s20
      %p273 = scmp.lt.s32.totalorder %s272, 63
      %s274 = scalar_select %p273, %s272, 63
      %s275 = smul.addr %s274, 8
      %s276 = scalar_lea.vmem %s0, %s275
      %p277 = pneg %p41
      %p278 = pneg %p38
      %p279 = pneg %p62
      %p280 = pneg %p59
      %p281 = pneg %p83
      %p282 = pneg %p80
      %p283 = pneg %p104
      %p284 = pneg %p101
      %p285 = pneg %p125
      %p286 = pneg %p122
      %p287 = pneg %p146
      %p288 = pneg %p143
      %p289 = pneg %p167
      %p290 = pneg %p164
      %p291 = pneg %p193
      %p292 = pneg %p190
      %p293 = scmp.lt.s32.totalorder %s20, 3
      %s294 = scalar_select %p293, %s20, 3
      %s295 = scalar_lea.vmem %s7, %s294
      %p296 = pneg %p219
      %p297 = pneg %p216
      %p298 = scmp.lt.s32.totalorder %s20, 3
      %s299 = scalar_select %p298, %s20, 3
      %s300 = scalar_lea.vmem %s8, %s299
      %s301 = smul.u32 16, %s20
      %p302 = scmp.lt.s32.totalorder %s301, 63
      %s303 = scalar_select %p302, %s301, 63
      %s304 = smul.addr %s303, 8
      %s305 = scalar_lea.vmem %s0, %s304
      %s306 = smul.u32 16, %s20
      %p307 = scmp.lt.s32.totalorder %s20, 3
      %s308 = scalar_select %p307, %s20, 3
      %s309 = scalar_lea.vmem %s7, %s308
      %p310 = scmp.lt.s32.totalorder %s20, 3
      %s311 = scalar_select %p310, %s20, 3
      %s312 = scalar_lea.vmem %s8, %s311
      %v314 = vld [vmem:[%s305] sm:$0xff]
      %v315 = vld [vmem:[%s305 + $0x8] sm:$0xff]
      %v316 = vld [vmem:[%s305 + $0x10] sm:$0xff]
      %v317 = vld [vmem:[%s305 + $0x18] sm:$0xff]
      %v318 = vld [vmem:[%s305 + $0x20] sm:$0xff]
      %v319 = vld [vmem:[%s305 + $0x28] sm:$0xff]
      %v320 = vld [vmem:[%s305 + $0x30] sm:$0xff]
      %v321 = vld [vmem:[%s305 + $0x38] sm:$0xff]
      %v322 = vld [vmem:[%s305 + $0x40] sm:$0xff]
      %v323 = vld [vmem:[%s305 + $0x48] sm:$0xff]
      %v324 = vld [vmem:[%s305 + $0x50] sm:$0xff]
      %v325 = vld [vmem:[%s305 + $0x58] sm:$0xff]
      %v326 = vld [vmem:[%s305 + $0x60] sm:$0xff]
      %v327 = vld [vmem:[%s305 + $0x68] sm:$0xff]
      %v328 = vld [vmem:[%s305 + $0x70] sm:$0xff]
      %v329 = vld [vmem:[%s305 + $0x78] sm:$0xff]
      %v330 = vpack.c.bf16 %v315, %v314
      %v331 = vpack.c.bf16 %v317, %v316
      %v332 = vpack.c.bf16 %v319, %v318
      %v333 = vpack.c.bf16 %v321, %v320
      %v334 = vpack.c.bf16 %v323, %v322
      %v335 = vpack.c.bf16 %v325, %v324
      %v336 = vpack.c.bf16 %v327, %v326
      %v337 = vpack.c.bf16 %v329, %v328
      %v338 = vld [vmem:[%s1] sm:$0xf]
      %v339 = vld [vmem:[%s1 + $0x4] sm:$0xf]
      %v340 = vld [vmem:[%s1 + $0x8] sm:$0xf]
      %v341 = vld [vmem:[%s1 + $0xc] sm:$0xf]
      %v342 = vld [vmem:[%s1 + $0x10] sm:$0xf]
      %v343 = vld [vmem:[%s1 + $0x14] sm:$0xf]
      %v344 = vld [vmem:[%s1 + $0x18] sm:$0xf]
      %v345 = vld [vmem:[%s1 + $0x1c] sm:$0xf]
      %v346 = vld [vmem:[%s2] sm:$0x1]
      %v348 = vlaneseq
      %v349 = vshrl.u32 %v348, 7
      %v350 = vsub.s32 0, %v349
      %v351 = vrot.slane %v346, %v350
      %v361 = vunpack.c.l.b16 %v338
      %v362 = vunpack.c.l.b16 %v339
      %v363 = vunpack.c.l.b16 %v340
      %v364 = vunpack.c.l.b16 %v341
      %v365 = vunpack.c.l.b16 %v342
      %v366 = vunpack.c.l.b16 %v343
      %v367 = vunpack.c.l.b16 %v344
      %v368 = vunpack.c.l.b16 %v345
      %v369 = vpack.c.b16 %v362, %v361
      %v370 = vpack.c.b16 %v364, %v363
      %v371 = vpack.c.b16 %v366, %v365
      %v372 = vpack.c.b16 %v368, %v367
      %vm377 = vcmask 523264
      %v379 = vsel %vm377, %v330, 0
      %v382 = vsel %vm377, %v331, 0
      %v385 = vsel %vm377, %v332, 0
      %v388 = vsel %vm377, %v333, 0
      %v391 = vsel %vm377, %v334, 0
      %v394 = vsel %vm377, %v335, 0
      %v397 = vsel %vm377, %v336, 0
      %v400 = vsel %vm377, %v337, 0
      %402 = vmatprep.subr.bf16.mxu0 0
      %403 = vmatpush1.bf16.msra.mxu0 %v369
      %404 = vmatprep.subr.bf16.mxu0 0
      %405 = vmatpush1.bf16.msra.mxu0 %v370
      %406 = vmatprep.subr.bf16.mxu0 0
      %407 = vmatpush1.bf16.msra.mxu0 %v371
      %408 = vmatprep.subr.bf16.mxu0 0
      %409 = vmatpush1.bf16.msra.mxu0 %v372
      %410 = vmatprep.subr.bf16.mxu0 0
      %411 = vmatpush1.bf16.msra.mxu0 0
      %412 = vmatprep.subr.bf16.mxu0 0
      %413 = vmatpush1.bf16.msra.mxu0 0
      %414 = vmatprep.subr.bf16.mxu0 0
      %415 = vmatpush1.bf16.msra.mxu0 0
      %416 = vmatprep.subr.bf16.mxu0 0
      %417 = vmatpush1.bf16.msra.mxu0 0
      %418 = vmatprep.subr.bf16.mxu0 0
      %419 = vmatpush1.bf16.msra.mxu0 0
      %420 = vmatprep.subr.bf16.mxu0 0
      %421 = vmatpush1.bf16.msra.mxu0 0
      %422 = vmatprep.subr.bf16.mxu0 0
      %423 = vmatpush1.bf16.msra.mxu0 0
      %424 = vmatprep.subr.bf16.mxu0 0
      %425 = vmatpush1.bf16.msra.mxu0 0
      %426 = vmatprep.subr.bf16.mxu0 0
      %427 = vmatpush1.bf16.msra.mxu0 0
      %428 = vmatprep.subr.bf16.mxu0 0
      %429 = vmatpush1.bf16.msra.mxu0 0
      %430 = vmatprep.subr.bf16.mxu0 0
      %431 = vmatpush1.bf16.msra.mxu0 0
      %432 = vmatprep.subr.bf16.mxu0 0
      %433 = vmatpush1.bf16.msra.mxu0 0
      %434 = vmatprep.mubr.bf16.mxu0 0
      %435 = vmatmul.mubr.bf16.gmra.mrb[0].mxu0 %v379
      %v436 = vpop.f32.mrb[0].mxu0
      %v437 = vadd.f32 %v351, %v436
      %v438 = vpop.f32.mrb[0].mxu0
      %v439 = vpop.f32.mrb[0].mxu0
      %v440 = vadd.f32 %v351, %v439
      %v441 = vpop.f32.mrb[0].mxu0
      %442 = vmatprep.mubr.bf16.mxu0 0
      %443 = vmatmul.mubr.bf16.gmra.mrb[0].mxu0 %v382
      %v444 = vpop.f32.mrb[0].mxu0
      %v445 = vadd.f32 %v351, %v444
      %v446 = vpop.f32.mrb[0].mxu0
      %v447 = vpop.f32.mrb[0].mxu0
      %v448 = vadd.f32 %v351, %v447
      %v449 = vpop.f32.mrb[0].mxu0
      %450 = vmatprep.mubr.bf16.mxu0 0
      %451 = vmatmul.mubr.bf16.gmra.mrb[0].mxu0 %v385
      %v452 = vpop.f32.mrb[0].mxu0
      %v453 = vadd.f32 %v351, %v452
      %v454 = vpop.f32.mrb[0].mxu0
      %v455 = vpop.f32.mrb[0].mxu0
      %v456 = vadd.f32 %v351, %v455
      %v457 = vpop.f32.mrb[0].mxu0
      %458 = vmatprep.mubr.bf16.mxu0 0
      %459 = vmatmul.mubr.bf16.gmra.mrb[0].mxu0 %v388
      %v460 = vpop.f32.mrb[0].mxu0
      %v461 = vadd.f32 %v351, %v460
      %v462 = vpop.f32.mrb[0].mxu0
      %v463 = vpop.f32.mrb[0].mxu0
      %v464 = vadd.f32 %v351, %v463
      %v465 = vpop.f32.mrb[0].mxu0
      %466 = vmatprep.mubr.bf16.mxu0 0
      %467 = vmatmul.mubr.bf16.gmra.mrb[0].mxu0 %v391
      %v468 = vpop.f32.mrb[0].mxu0
      %v469 = vadd.f32 %v351, %v468
      %v470 = vpop.f32.mrb[0].mxu0
      %v471 = vpop.f32.mrb[0].mxu0
      %v472 = vadd.f32 %v351, %v471
      %v473 = vpop.f32.mrb[0].mxu0
      %474 = vmatprep.mubr.bf16.mxu0 0
      %475 = vmatmul.mubr.bf16.gmra.mrb[0].mxu0 %v394
      %v476 = vpop.f32.mrb[0].mxu0
      %v477 = vadd.f32 %v351, %v476
      %v478 = vpop.f32.mrb[0].mxu0
      %v479 = vpop.f32.mrb[0].mxu0
      %v480 = vadd.f32 %v351, %v479
      %v481 = vpop.f32.mrb[0].mxu0
      %482 = vmatprep.mubr.bf16.mxu0 0
      %483 = vmatmul.mubr.bf16.gmra.mrb[0].mxu0 %v397
      %v484 = vpop.f32.mrb[0].mxu0
      %v485 = vadd.f32 %v351, %v484
      %v486 = vpop.f32.mrb[0].mxu0
      %v487 = vpop.f32.mrb[0].mxu0
      %v488 = vadd.f32 %v351, %v487
      %v489 = vpop.f32.mrb[0].mxu0
      %490 = vmatprep.mubr.bf16.mxu0 0
      %491 = vmatmul.mubr.bf16.gmra.mrb[0].mxu0 %v400
      %v492 = vpop.f32.mrb[0].mxu0
      %v493 = vadd.f32 %v351, %v492
      %v494 = vpop.f32.mrb[0].mxu0
      %v495 = vpop.f32.mrb[0].mxu0
      %v496 = vadd.f32 %v351, %v495
      %v497 = vpop.f32.mrb[0].mxu0
      %498 = vdwg.mxu0
      %v499 = vld [vmem:[%s3] sm:$0x1]
      %v500 = vld [vmem:[%s4] sm:$0x1]
      %v502 = vlaneseq
      %v503 = vshrl.u32 %v502, 7
      %v504 = vsub.s32 0, %v503
      %v505 = vrot.slane %v499, %v504
      %v507 = vsub.f32 %v437, %v505
      %v508 = vsub.f32 %v440, %v505
      %v509 = vsub.f32 %v445, %v505
      %v510 = vsub.f32 %v448, %v505
      %v511 = vsub.f32 %v453, %v505
      %v512 = vsub.f32 %v456, %v505
      %v513 = vsub.f32 %v461, %v505
      %v514 = vsub.f32 %v464, %v505
      %v515 = vsub.f32 %v469, %v505
      %v516 = vsub.f32 %v472, %v505
      %v517 = vsub.f32 %v477, %v505
      %v518 = vsub.f32 %v480, %v505
      %v519 = vsub.f32 %v485, %v505
      %v520 = vsub.f32 %v488, %v505
      %v521 = vsub.f32 %v493, %v505
      %v522 = vsub.f32 %v496, %v505
      %v524 = vlaneseq
      %v525 = vshrl.u32 %v524, 7
      %v526 = vsub.s32 0, %v525
      %v527 = vrot.slane %v500, %v526
      %v529 = vmul.f32 %v507, %v527
      %v530 = vmul.f32 %v508, %v527
      %v531 = vmul.f32 %v509, %v527
      %v532 = vmul.f32 %v510, %v527
      %v533 = vmul.f32 %v511, %v527
      %v534 = vmul.f32 %v512, %v527
      %v535 = vmul.f32 %v513, %v527
      %v536 = vmul.f32 %v514, %v527
      %v537 = vmul.f32 %v515, %v527
      %v538 = vmul.f32 %v516, %v527
      %v539 = vmul.f32 %v517, %v527
      %v540 = vmul.f32 %v518, %v527
      %v541 = vmul.f32 %v519, %v527
      %v542 = vmul.f32 %v520, %v527
      %v543 = vmul.f32 %v521, %v527
      %v544 = vmul.f32 %v522, %v527
      %vm545 = vcmp.ge.f32.partialorder %v529, 0.0
      %vm546 = vcmp.ge.f32.partialorder %v530, 0.0
      %vm547 = vcmp.ge.f32.partialorder %v531, 0.0
      %vm548 = vcmp.ge.f32.partialorder %v532, 0.0
      %vm549 = vcmp.ge.f32.partialorder %v533, 0.0
      %vm550 = vcmp.ge.f32.partialorder %v534, 0.0
      %vm551 = vcmp.ge.f32.partialorder %v535, 0.0
      %vm552 = vcmp.ge.f32.partialorder %v536, 0.0
      %vm553 = vcmp.ge.f32.partialorder %v537, 0.0
      %vm554 = vcmp.ge.f32.partialorder %v538, 0.0
      %vm555 = vcmp.ge.f32.partialorder %v539, 0.0
      %vm556 = vcmp.ge.f32.partialorder %v540, 0.0
      %vm557 = vcmp.ge.f32.partialorder %v541, 0.0
      %vm558 = vcmp.ge.f32.partialorder %v542, 0.0
      %vm559 = vcmp.ge.f32.partialorder %v543, 0.0
      %vm560 = vcmp.ge.f32.partialorder %v544, 0.0
      %v561 = vmul.f32 %v529, 0.2
      %v562 = vmul.f32 %v530, 0.2
      %v563 = vmul.f32 %v531, 0.2
      %v564 = vmul.f32 %v532, 0.2
      %v565 = vmul.f32 %v533, 0.2
      %v566 = vmul.f32 %v534, 0.2
      %v567 = vmul.f32 %v535, 0.2
      %v568 = vmul.f32 %v536, 0.2
      %v569 = vmul.f32 %v537, 0.2
      %v570 = vmul.f32 %v538, 0.2
      %v571 = vmul.f32 %v539, 0.2
      %v572 = vmul.f32 %v540, 0.2
      %v573 = vmul.f32 %v541, 0.2
      %v574 = vmul.f32 %v542, 0.2
      %v575 = vmul.f32 %v543, 0.2
      %v576 = vmul.f32 %v544, 0.2
      %v577 = vsel %vm545, %v529, %v561
      %v578 = vsel %vm546, %v530, %v562
      %v579 = vsel %vm547, %v531, %v563
      %v580 = vsel %vm548, %v532, %v564
      %v581 = vsel %vm549, %v533, %v565
      %v582 = vsel %vm550, %v534, %v566
      %v583 = vsel %vm551, %v535, %v567
      %v584 = vsel %vm552, %v536, %v568
      %v585 = vsel %vm553, %v537, %v569
      %v586 = vsel %vm554, %v538, %v570
      %v587 = vsel %vm555, %v539, %v571
      %v588 = vsel %vm556, %v540, %v572
      %v589 = vsel %vm557, %v541, %v573
      %v590 = vsel %vm558, %v542, %v574
      %v591 = vsel %vm559, %v543, %v575
      %v592 = vsel %vm560, %v544, %v576
      %v593 = vpack.c.bf16 %v578, %v577
      %v594 = vpack.c.bf16 %v580, %v579
      %v595 = vpack.c.bf16 %v582, %v581
      %v596 = vpack.c.bf16 %v584, %v583
      %v597 = vpack.c.bf16 %v586, %v585
      %v598 = vpack.c.bf16 %v588, %v587
      %v599 = vpack.c.bf16 %v590, %v589
      %v600 = vpack.c.bf16 %v592, %v591
      %v601 = vld [vmem:[%s5] sm:$0xf]
      %v602 = vld [vmem:[%s5 + $0x4] sm:$0xf]
      %v603 = vld [vmem:[%s5 + $0x8] sm:$0xf]
      %v604 = vld [vmem:[%s5 + $0xc] sm:$0xf]
      %v605 = vld [vmem:[%s5 + $0x10] sm:$0xf]
      %v606 = vld [vmem:[%s5 + $0x14] sm:$0xf]
      %v607 = vld [vmem:[%s5 + $0x18] sm:$0xf]
      %v608 = vld [vmem:[%s5 + $0x1c] sm:$0xf]
      %v609 = vld [vmem:[%s5 + $0x20] sm:$0xf]
      %v610 = vld [vmem:[%s5 + $0x24] sm:$0xf]
      %v611 = vld [vmem:[%s5 + $0x28] sm:$0xf]
      %v612 = vld [vmem:[%s5 + $0x2c] sm:$0xf]
      %v613 = vld [vmem:[%s5 + $0x30] sm:$0xf]
      %v614 = vld [vmem:[%s5 + $0x34] sm:$0xf]
      %v615 = vld [vmem:[%s5 + $0x38] sm:$0xf]
      %v616 = vld [vmem:[%s5 + $0x3c] sm:$0xf]
      %v617 = vld [vmem:[%s6] sm:$0x1]
      %v619 = vlaneseq
      %v620 = vshrl.u32 %v619, 7
      %v621 = vsub.s32 0, %v620
      %v622 = vrot.slane %v617, %v621
      %v640 = vunpack.c.l.b16 %v601
      %v641 = vunpack.c.l.b16 %v602
      %v642 = vunpack.c.l.b16 %v603
      %v643 = vunpack.c.l.b16 %v604
      %v644 = vunpack.c.l.b16 %v605
      %v645 = vunpack.c.l.b16 %v606
      %v646 = vunpack.c.l.b16 %v607
      %v647 = vunpack.c.l.b16 %v608
      %v648 = vunpack.c.l.b16 %v609
      %v649 = vunpack.c.l.b16 %v610
      %v650 = vunpack.c.l.b16 %v611
      %v651 = vunpack.c.l.b16 %v612
      %v652 = vunpack.c.l.b16 %v613
      %v653 = vunpack.c.l.b16 %v614
      %v654 = vunpack.c.l.b16 %v615
      %v655 = vunpack.c.l.b16 %v616
      %v656 = vpack.c.b16 %v641, %v640
      %v657 = vpack.c.b16 %v643, %v642
      %v658 = vpack.c.b16 %v645, %v644
      %v659 = vpack.c.b16 %v647, %v646
      %v660 = vpack.c.b16 %v649, %v648
      %v661 = vpack.c.b16 %v651, %v650
      %v662 = vpack.c.b16 %v653, %v652
      %v663 = vpack.c.b16 %v655, %v654
      %672 = vmatprep.subr.bf16.mxu0 0
      %673 = vmatpush1.bf16.msra.mxu0 %v656
      %674 = vmatprep.subr.bf16.mxu0 0
      %675 = vmatpush1.bf16.msra.mxu0 %v657
      %676 = vmatprep.subr.bf16.mxu0 0
      %677 = vmatpush1.bf16.msra.mxu0 %v658
      %678 = vmatprep.subr.bf16.mxu0 0
      %679 = vmatpush1.bf16.msra.mxu0 %v659
      %680 = vmatprep.subr.bf16.mxu0 0
      %681 = vmatpush1.bf16.msra.mxu0 %v660
      %682 = vmatprep.subr.bf16.mxu0 0
      %683 = vmatpush1.bf16.msra.mxu0 %v661
      %684 = vmatprep.subr.bf16.mxu0 0
      %685 = vmatpush1.bf16.msra.mxu0 %v662
      %686 = vmatprep.subr.bf16.mxu0 0
      %687 = vmatpush1.bf16.msra.mxu0 %v663
      %688 = vmatprep.subr.bf16.mxu0 0
      %689 = vmatpush1.bf16.msra.mxu0 0
      %690 = vmatprep.subr.bf16.mxu0 0
      %691 = vmatpush1.bf16.msra.mxu0 0
      %692 = vmatprep.subr.bf16.mxu0 0
      %693 = vmatpush1.bf16.msra.mxu0 0
      %694 = vmatprep.subr.bf16.mxu0 0
      %695 = vmatpush1.bf16.msra.mxu0 0
      %696 = vmatprep.subr.bf16.mxu0 0
      %697 = vmatpush1.bf16.msra.mxu0 0
      %698 = vmatprep.subr.bf16.mxu0 0
      %699 = vmatpush1.bf16.msra.mxu0 0
      %700 = vmatprep.subr.bf16.mxu0 0
      %701 = vmatpush1.bf16.msra.mxu0 0
      %702 = vmatprep.subr.bf16.mxu0 0
      %703 = vmatpush1.bf16.msra.mxu0 0
      %704 = vmatprep.mubr.bf16.mxu0 0
      %705 = vmatmul.mubr.bf16.gmra.mrb[0].mxu0 %v593
      %v706 = vpop.f32.mrb[0].mxu0
      %v707 = vadd.f32 %v622, %v706
      %v708 = vpop.f32.mrb[0].mxu0
      %v709 = vpop.f32.mrb[0].mxu0
      %v710 = vadd.f32 %v622, %v709
      %v711 = vpop.f32.mrb[0].mxu0
      %712 = vmatprep.mubr.bf16.mxu0 0
      %713 = vmatmul.mubr.bf16.gmra.mrb[0].mxu0 %v594
      %v714 = vpop.f32.mrb[0].mxu0
      %v715 = vadd.f32 %v622, %v714
      %v716 = vpop.f32.mrb[0].mxu0
      %v717 = vpop.f32.mrb[0].mxu0
      %v718 = vadd.f32 %v622, %v717
      %v719 = vpop.f32.mrb[0].mxu0
      %720 = vmatprep.mubr.bf16.mxu0 0
      %721 = vmatmul.mubr.bf16.gmra.mrb[0].mxu0 %v595
      %v722 = vpop.f32.mrb[0].mxu0
      %v723 = vadd.f32 %v622, %v722
      %v724 = vpop.f32.mrb[0].mxu0
      %v725 = vpop.f32.mrb[0].mxu0
      %v726 = vadd.f32 %v622, %v725
      %v727 = vpop.f32.mrb[0].mxu0
      %728 = vmatprep.mubr.bf16.mxu0 0
      %729 = vmatmul.mubr.bf16.gmra.mrb[0].mxu0 %v596
      %v730 = vpop.f32.mrb[0].mxu0
      %v731 = vadd.f32 %v622, %v730
      %v732 = vpop.f32.mrb[0].mxu0
      %v733 = vpop.f32.mrb[0].mxu0
      %v734 = vadd.f32 %v622, %v733
      %v735 = vpop.f32.mrb[0].mxu0
      %736 = vmatprep.mubr.bf16.mxu0 0
      %737 = vmatmul.mubr.bf16.gmra.mrb[0].mxu0 %v597
      %v738 = vpop.f32.mrb[0].mxu0
      %v739 = vadd.f32 %v622, %v738
      %v740 = vpop.f32.mrb[0].mxu0
      %v741 = vpop.f32.mrb[0].mxu0
      %v742 = vadd.f32 %v622, %v741
      %v743 = vpop.f32.mrb[0].mxu0
      %744 = vmatprep.mubr.bf16.mxu0 0
      %745 = vmatmul.mubr.bf16.gmra.mrb[0].mxu0 %v598
      %v746 = vpop.f32.mrb[0].mxu0
      %v747 = vadd.f32 %v622, %v746
      %v748 = vpop.f32.mrb[0].mxu0
      %v749 = vpop.f32.mrb[0].mxu0
      %v750 = vadd.f32 %v622, %v749
      %v751 = vpop.f32.mrb[0].mxu0
      %752 = vmatprep.mubr.bf16.mxu0 0
      %753 = vmatmul.mubr.bf16.gmra.mrb[0].mxu0 %v599
      %v754 = vpop.f32.mrb[0].mxu0
      %v755 = vadd.f32 %v622, %v754
      %v756 = vpop.f32.mrb[0].mxu0
      %v757 = vpop.f32.mrb[0].mxu0
      %v758 = vadd.f32 %v622, %v757
      %v759 = vpop.f32.mrb[0].mxu0
      %760 = vmatprep.mubr.bf16.mxu0 0
      %761 = vmatmul.mubr.bf16.gmra.mrb[0].mxu0 %v600
      %v762 = vpop.f32.mrb[0].mxu0
      %v763 = vadd.f32 %v622, %v762
      %v764 = vpop.f32.mrb[0].mxu0
      %v765 = vpop.f32.mrb[0].mxu0
      %v766 = vadd.f32 %v622, %v765
      %v767 = vpop.f32.mrb[0].mxu0
      %768 = vdwg.mxu0
      %v769 = vadd.f32 %v707, %v710
      %v770 = vadd.f32 %v769, %v715
      %v771 = vadd.f32 %v770, %v718
      %v772 = vadd.f32 %v771, %v723
      %v773 = vadd.f32 %v772, %v726
      %v774 = vadd.f32 %v773, %v731
      %v775 = vadd.f32 %v774, %v734
      %v776 = vadd.f32 %v775, %v739
      %v777 = vadd.f32 %v776, %v742
      %v778 = vadd.f32 %v777, %v747
      %v779 = vadd.f32 %v778, %v750
      %v780 = vadd.f32 %v779, %v755
      %v781 = vadd.f32 %v780, %v758
      %v782 = vadd.f32 %v781, %v763
      %v783 = vadd.f32 %v782, %v766
      %v784 = vrot.slane %v783, 4
      %v785 = vadd.f32 %v783, %v784
      %v786 = vrot.slane %v785, 2
      %v787 = vadd.f32 %v785, %v786
      %v788 = vrot.slane %v787, 1
      %v789 = vadd.f32 %v787, %v788
      %v790 = vmul.f32 %v707, %v707
      %v791 = vmul.f32 %v710, %v710
      %v792 = vmul.f32 %v715, %v715
      %v793 = vmul.f32 %v718, %v718
      %v794 = vmul.f32 %v723, %v723
      %v795 = vmul.f32 %v726, %v726
      %v796 = vmul.f32 %v731, %v731
      %v797 = vmul.f32 %v734, %v734
      %v798 = vmul.f32 %v739, %v739
      %v799 = vmul.f32 %v742, %v742
      %v800 = vmul.f32 %v747, %v747
      %v801 = vmul.f32 %v750, %v750
      %v802 = vmul.f32 %v755, %v755
      %v803 = vmul.f32 %v758, %v758
      %v804 = vmul.f32 %v763, %v763
      %v805 = vmul.f32 %v766, %v766
      %v806 = vadd.f32 %v790, %v791
      %v807 = vadd.f32 %v806, %v792
      %v808 = vadd.f32 %v807, %v793
      %v809 = vadd.f32 %v808, %v794
      %v810 = vadd.f32 %v809, %v795
      %v811 = vadd.f32 %v810, %v796
      %v812 = vadd.f32 %v811, %v797
      %v813 = vadd.f32 %v812, %v798
      %v814 = vadd.f32 %v813, %v799
      %v815 = vadd.f32 %v814, %v800
      %v816 = vadd.f32 %v815, %v801
      %v817 = vadd.f32 %v816, %v802
      %v818 = vadd.f32 %v817, %v803
      %v819 = vadd.f32 %v818, %v804
      %v820 = vadd.f32 %v819, %v805
      %v821 = vrot.slane %v820, 4
      %v822 = vadd.f32 %v820, %v821
      %v823 = vrot.slane %v822, 2
      %v824 = vadd.f32 %v822, %v823
      %v825 = vrot.slane %v824, 1
      %v826 = vadd.f32 %v824, %v825
      %827 = vst [vmem:[%s309] sm:$0x1] %v789
      %828 = vst [vmem:[%s312] sm:$0x1] %v826
      %p829 = scmp.lt.s32.totalorder %s20, 3
      %s830 = scalar_select %p829, %s20, 3
      %s831 = scalar_lea.vmem %s7, %s830
      %p832 = scmp.lt.s32.totalorder %s20, 3
      %s833 = scalar_select %p832, %s20, 3
      %s834 = scalar_lea.vmem %s8, %s833
      // Predicated region
      $region49: #{mlp_forward.4} parent=47 // pred_check
        %p835 = pneg %p190
      $region50: #{mlp_forward.4} parent=47 // pred_check_branch
        %837 = sbr.rel (%p835) target = $region52
      $region51: #{mlp_forward.4} parent=47 // pred_region
        _
      $region52: #{mlp_forward.4} parent=47 // pred_fallthru
        _
      // Predicated region
      $region53: #{mlp_forward.4} parent=47 // pred_check
        %p838 = pneg %p216
      $region54: #{mlp_forward.4} parent=47 // pred_check_branch
        %840 = sbr.rel (%p838) target = $region56
      $region55: #{mlp_forward.4} parent=47 // pred_region
        _
      $region56: #{mlp_forward.4} parent=47 // pred_fallthru
        _
    $region48: #{mlp_forward.4} parent=5 // pred_fallthru
      _
    %p841 = scmp.le.s32.totalorder 2, %s15
    // Predicated region
    $region57: #{mlp_forward.4} parent=5 // pred_check
      %p842 = pneg %p841
    $region58: #{mlp_forward.4} parent=5 // pred_check_branch
      %844 = sbr.rel (%p842) target = $region60
    $region59: #{mlp_forward.4} parent=5 // pred_region
      %s845 = ssub.s32 %s15, 2
      // Predicated region
      $region61: #{mlp_forward.4} parent=59 // pred_check
        %p846 = pneg %p196
      $region62: #{mlp_forward.4} parent=59 // pred_check_branch
        %848 = sbr.rel (%p846) target = $region64
      $region63: #{mlp_forward.4} parent=59 // pred_region
        %p849 = scmp.lt.s32.totalorder %s21, 3
        %s850 = scalar_select %p849, %s21, 3
        %s851 = scalar_lea.vmem %s7, %s850
      $region64: #{mlp_forward.4} parent=59 // pred_fallthru
        _
      // Predicated region
      $region65: #{mlp_forward.4} parent=59 // pred_check
        %p852 = pneg %p222
      $region66: #{mlp_forward.4} parent=59 // pred_check_branch
        %854 = sbr.rel (%p852) target = $region68
      $region67: #{mlp_forward.4} parent=59 // pred_region
        %p855 = scmp.lt.s32.totalorder %s21, 3
        %s856 = scalar_select %p855, %s21, 3
        %s857 = scalar_lea.vmem %s8, %s856
      $region68: #{mlp_forward.4} parent=59 // pred_fallthru
        _
    $region60: #{mlp_forward.4} parent=5 // pred_fallthru
      _
  $region6: #{mlp_forward.4} parent=0 // loop_footer
    %s19 = sadd.s32 1, %s15
  $region7: #{mlp_forward.4} parent=0 // loop_footer_branch
    %14 = sbr.rel target = $region3
  $region8: #{mlp_forward.4} parent=0 // loop_exit
    _

// kernel: mlp_forward.5
$region0: #{mlp_forward.5}
  #allocation0 [shape = 'u32[]', space=smem, size = 0x4, offset = 0x4, fixed_abs, tag = 'smem constant byte address 0x4 - core index']
  #allocation1 [shape = 'u32[144,128]{1,0:T(1,128)}', space=vmem, size = 0x12000, scoped, tag = 'internal scratch']
  %s0 = inlined_call_operand.vmem [shape: f32[512,64], index: 0, kind: input, shape index: {}]
  %s1 = inlined_call_operand.vmem [shape: bf16[64,128], index: 1, kind: input, shape index: {}]
  %s2 = inlined_call_operand.vmem [shape: f32[1,128], index: 2, kind: input, shape index: {}]
  %s3 = inlined_call_operand.vmem [shape: f32[1,128], index: 3, kind: input, shape index: {}]
  %s4 = inlined_call_operand.vmem [shape: f32[1,128], index: 4, kind: input, shape index: {}]
  %s5 = inlined_call_operand.vmem [shape: f32[1,128], index: 5, kind: input, shape index: {}]
  %s6 = inlined_call_operand.vmem [shape: f32[1,128], index: 6, kind: input, shape index: {}]
  %s7 = inlined_call_operand.vmem [shape: bf16[128,128], index: 7, kind: input, shape index: {}]
  %s8 = inlined_call_operand.vmem [shape: f32[1,128], index: 8, kind: input, shape index: {}]
  %s9 = inlined_call_operand.vmem [shape: f32[1,128], index: 9, kind: input, shape index: {}]
  %s10 = inlined_call_operand.vmem [shape: f32[512,1], index: 10, kind: output, shape index: {}]
  %s11 = sld [smem:[#allocation0]]
  $region73: #{mlp_forward.5} parent=0
    _
  %s13 = ssub.s32 1, %s11
  %s14 = scalar_select 0, %s13, %s11
  loop: start=0, step=1, limit=6
  $region2: #{mlp_forward.5} parent=0 // loop_pre_header
    _
  $region3: #{mlp_forward.5} parent=0 // loop_header
    %s16 = sphi 0, %s20
    %p17 = scmp.ge.s32.totalorder %s16, 6
    %s26 = sphi 0, %s28
    %s29 = sphi 0, %s26
    %s30 = sphi 0, %s29
    %s46 = sphi 0, %s30
    %s50 = sphi 0, %s50
    %s52 = sphi 0, %s50
    %s53 = sphi 0, %s52
    %s67 = sphi 0, %s53
    %s71 = sphi 0, %s71
    %s73 = sphi 0, %s71
    %s74 = sphi 0, %s73
    %s88 = sphi 0, %s74
    %s92 = sphi 0, %s92
    %s94 = sphi 0, %s92
    %s95 = sphi 0, %s94
    %s109 = sphi 0, %s95
    %s113 = sphi 0, %s113
    %s115 = sphi 0, %s113
    %s116 = sphi 0, %s115
    %s130 = sphi 0, %s116
    %s134 = sphi 0, %s134
    %s136 = sphi 0, %s134
    %s137 = sphi 0, %s136
    %s151 = sphi 0, %s137
    %s155 = sphi 0, %s155
    %s157 = sphi 0, %s155
    %s158 = sphi 0, %s157
    %s172 = sphi 0, %s158
    %s176 = sphi 0, %s176
    %s178 = sphi 0, %s176
    %s179 = sphi 0, %s178
    %s193 = sphi 0, %s179
    %s197 = sphi 0, %s197
    %s199 = sphi 0, %s197
    %s200 = sphi 0, %s199
    %s214 = sphi 0, %s200
    %s218 = sphi 0, %s218
    %s220 = sphi 0, %s218
    %s221 = sphi 0, %s220
    %s235 = sphi 0, %s221
    %s241 = sphi 0, %s243
    %s244 = sphi 0, %s241
    %s245 = sphi 0, %s244
    %s261 = sphi 0, %s245
  $region4: #{mlp_forward.5} parent=0 // loop_header_branch
    %19 = sbr.rel (%p17) target = $region8
  $region5: #{mlp_forward.5} parent=0 // loop_body
    %s21 = ssub.s32 %s16, 1
    %s22 = ssub.s32 %s16, 2
    %s23 = sadd.s32 %s16, 1
    %s24 = ssub.s32 %s16, %s23
    %p25 = scmp.eq.s32.totalorder %s24, 0
    %s27 = sadd.s32 %s26, 1
    %s28 = scalar_select %p25, %s26, %s27
    %p31 = pneg %p25
    %p32 = scmp.eq.s32.totalorder %s16, 3
    %p33 = por %p31, %p32
    %p34 = scmp.ne.s32.totalorder %s26, %s29
    %p35 = scmp.eq.s32.totalorder %s16, 0
    %p36 = por %p34, %p35
    %p37 = scmp.ne.s32.totalorder %s26, %s29
    %p38 = scmp.eq.s32.totalorder %s21, 3
    %p39 = por %p37, %p38
    %p40 = scmp.ne.s32.totalorder %s29, %s30
    %p41 = scmp.eq.s32.totalorder %s21, 0
    %p42 = por %p40, %p41
    %p43 = scmp.ne.s32.totalorder %s29, %s30
    %p44 = scmp.eq.s32.totalorder %s22, 3
    %p45 = por %p43, %p44
    %p47 = scmp.ne.s32.totalorder %s30, %s46
    %p48 = scmp.eq.s32.totalorder %s22, 0
    %p49 = por %p47, %p48
    %s51 = sadd.s32 %s50, 1
    %p54 = scmp.eq.s32.totalorder %s16, 3
    %p55 = scmp.ne.s32.totalorder %s50, %s52
    %p56 = scmp.eq.s32.totalorder %s16, 0
    %p57 = por %p55, %p56
    %p58 = scmp.ne.s32.totalorder %s50, %s52
    %p59 = scmp.eq.s32.totalorder %s21, 3
    %p60 = por %p58, %p59
    %p61 = scmp.ne.s32.totalorder %s52, %s53
    %p62 = scmp.eq.s32.totalorder %s21, 0
    %p63 = por %p61, %p62
    %p64 = scmp.ne.s32.totalorder %s52, %s53
    %p65 = scmp.eq.s32.totalorder %s22, 3
    %p66 = por %p64, %p65
    %p68 = scmp.ne.s32.totalorder %s53, %s67
    %p69 = scmp.eq.s32.totalorder %s22, 0
    %p70 = por %p68, %p69
    %s72 = sadd.s32 %s71, 1
    %p75 = scmp.eq.s32.totalorder %s16, 3
    %p76 = scmp.ne.s32.totalorder %s71, %s73
    %p77 = scmp.eq.s32.totalorder %s16, 0
    %p78 = por %p76, %p77
    %p79 = scmp.ne.s32.totalorder %s71, %s73
    %p80 = scmp.eq.s32.totalorder %s21, 3
    %p81 = por %p79, %p80
    %p82 = scmp.ne.s32.totalorder %s73, %s74
    %p83 = scmp.eq.s32.totalorder %s21, 0
    %p84 = por %p82, %p83
    %p85 = scmp.ne.s32.totalorder %s73, %s74
    %p86 = scmp.eq.s32.totalorder %s22, 3
    %p87 = por %p85, %p86
    %p89 = scmp.ne.s32.totalorder %s74, %s88
    %p90 = scmp.eq.s32.totalorder %s22, 0
    %p91 = por %p89, %p90
    %s93 = sadd.s32 %s92, 1
    %p96 = scmp.eq.s32.totalorder %s16, 3
    %p97 = scmp.ne.s32.totalorder %s92, %s94
    %p98 = scmp.eq.s32.totalorder %s16, 0
    %p99 = por %p97, %p98
    %p100 = scmp.ne.s32.totalorder %s92, %s94
    %p101 = scmp.eq.s32.totalorder %s21, 3
    %p102 = por %p100, %p101
    %p103 = scmp.ne.s32.totalorder %s94, %s95
    %p104 = scmp.eq.s32.totalorder %s21, 0
    %p105 = por %p103, %p104
    %p106 = scmp.ne.s32.totalorder %s94, %s95
    %p107 = scmp.eq.s32.totalorder %s22, 3
    %p108 = por %p106, %p107
    %p110 = scmp.ne.s32.totalorder %s95, %s109
    %p111 = scmp.eq.s32.totalorder %s22, 0
    %p112 = por %p110, %p111
    %s114 = sadd.s32 %s113, 1
    %p117 = scmp.eq.s32.totalorder %s16, 3
    %p118 = scmp.ne.s32.totalorder %s113, %s115
    %p119 = scmp.eq.s32.totalorder %s16, 0
    %p120 = por %p118, %p119
    %p121 = scmp.ne.s32.totalorder %s113, %s115
    %p122 = scmp.eq.s32.totalorder %s21, 3
    %p123 = por %p121, %p122
    %p124 = scmp.ne.s32.totalorder %s115, %s116
    %p125 = scmp.eq.s32.totalorder %s21, 0
    %p126 = por %p124, %p125
    %p127 = scmp.ne.s32.totalorder %s115, %s116
    %p128 = scmp.eq.s32.totalorder %s22, 3
    %p129 = por %p127, %p128
    %p131 = scmp.ne.s32.totalorder %s116, %s130
    %p132 = scmp.eq.s32.totalorder %s22, 0
    %p133 = por %p131, %p132
    %s135 = sadd.s32 %s134, 1
    %p138 = scmp.eq.s32.totalorder %s16, 3
    %p139 = scmp.ne.s32.totalorder %s134, %s136
    %p140 = scmp.eq.s32.totalorder %s16, 0
    %p141 = por %p139, %p140
    %p142 = scmp.ne.s32.totalorder %s134, %s136
    %p143 = scmp.eq.s32.totalorder %s21, 3
    %p144 = por %p142, %p143
    %p145 = scmp.ne.s32.totalorder %s136, %s137
    %p146 = scmp.eq.s32.totalorder %s21, 0
    %p147 = por %p145, %p146
    %p148 = scmp.ne.s32.totalorder %s136, %s137
    %p149 = scmp.eq.s32.totalorder %s22, 3
    %p150 = por %p148, %p149
    %p152 = scmp.ne.s32.totalorder %s137, %s151
    %p153 = scmp.eq.s32.totalorder %s22, 0
    %p154 = por %p152, %p153
    %s156 = sadd.s32 %s155, 1
    %p159 = scmp.eq.s32.totalorder %s16, 3
    %p160 = scmp.ne.s32.totalorder %s155, %s157
    %p161 = scmp.eq.s32.totalorder %s16, 0
    %p162 = por %p160, %p161
    %p163 = scmp.ne.s32.totalorder %s155, %s157
    %p164 = scmp.eq.s32.totalorder %s21, 3
    %p165 = por %p163, %p164
    %p166 = scmp.ne.s32.totalorder %s157, %s158
    %p167 = scmp.eq.s32.totalorder %s21, 0
    %p168 = por %p166, %p167
    %p169 = scmp.ne.s32.totalorder %s157, %s158
    %p170 = scmp.eq.s32.totalorder %s22, 3
    %p171 = por %p169, %p170
    %p173 = scmp.ne.s32.totalorder %s158, %s172
    %p174 = scmp.eq.s32.totalorder %s22, 0
    %p175 = por %p173, %p174
    %s177 = sadd.s32 %s176, 1
    %p180 = scmp.eq.s32.totalorder %s16, 3
    %p181 = scmp.ne.s32.totalorder %s176, %s178
    %p182 = scmp.eq.s32.totalorder %s16, 0
    %p183 = por %p181, %p182
    %p184 = scmp.ne.s32.totalorder %s176, %s178
    %p185 = scmp.eq.s32.totalorder %s21, 3
    %p186 = por %p184, %p185
    %p187 = scmp.ne.s32.totalorder %s178, %s179
    %p188 = scmp.eq.s32.totalorder %s21, 0
    %p189 = por %p187, %p188
    %p190 = scmp.ne.s32.totalorder %s178, %s179
    %p191 = scmp.eq.s32.totalorder %s22, 3
    %p192 = por %p190, %p191
    %p194 = scmp.ne.s32.totalorder %s179, %s193
    %p195 = scmp.eq.s32.totalorder %s22, 0
    %p196 = por %p194, %p195
    %s198 = sadd.s32 %s197, 1
    %p201 = scmp.eq.s32.totalorder %s16, 3
    %p202 = scmp.ne.s32.totalorder %s197, %s199
    %p203 = scmp.eq.s32.totalorder %s16, 0
    %p204 = por %p202, %p203
    %p205 = scmp.ne.s32.totalorder %s197, %s199
    %p206 = scmp.eq.s32.totalorder %s21, 3
    %p207 = por %p205, %p206
    %p208 = scmp.ne.s32.totalorder %s199, %s200
    %p209 = scmp.eq.s32.totalorder %s21, 0
    %p210 = por %p208, %p209
    %p211 = scmp.ne.s32.totalorder %s199, %s200
    %p212 = scmp.eq.s32.totalorder %s22, 3
    %p213 = por %p211, %p212
    %p215 = scmp.ne.s32.totalorder %s200, %s214
    %p216 = scmp.eq.s32.totalorder %s22, 0
    %p217 = por %p215, %p216
    %s219 = sadd.s32 %s218, 1
    %p222 = scmp.eq.s32.totalorder %s16, 3
    %p223 = scmp.ne.s32.totalorder %s218, %s220
    %p224 = scmp.eq.s32.totalorder %s16, 0
    %p225 = por %p223, %p224
    %p226 = scmp.ne.s32.totalorder %s218, %s220
    %p227 = scmp.eq.s32.totalorder %s21, 3
    %p228 = por %p226, %p227
    %p229 = scmp.ne.s32.totalorder %s220, %s221
    %p230 = scmp.eq.s32.totalorder %s21, 0
    %p231 = por %p229, %p230
    %p232 = scmp.ne.s32.totalorder %s220, %s221
    %p233 = scmp.eq.s32.totalorder %s22, 3
    %p234 = por %p232, %p233
    %p236 = scmp.ne.s32.totalorder %s221, %s235
    %p237 = scmp.eq.s32.totalorder %s22, 0
    %p238 = por %p236, %p237
    %s239 = ssub.s32 %s16, %s23
    %p240 = scmp.eq.s32.totalorder %s239, 0
    %s242 = sadd.s32 %s241, 1
    %s243 = scalar_select %p240, %s241, %s242
    %p246 = pneg %p240
    %p247 = scmp.eq.s32.totalorder %s16, 3
    %p248 = por %p246, %p247
    %p249 = scmp.ne.s32.totalorder %s241, %s244
    %p250 = scmp.eq.s32.totalorder %s16, 0
    %p251 = por %p249, %p250
    %p252 = scmp.ne.s32.totalorder %s241, %s244
    %p253 = scmp.eq.s32.totalorder %s21, 3
    %p254 = por %p252, %p253
    %p255 = scmp.ne.s32.totalorder %s244, %s245
    %p256 = scmp.eq.s32.totalorder %s21, 0
    %p257 = por %p255, %p256
    %p258 = scmp.ne.s32.totalorder %s244, %s245
    %p259 = scmp.eq.s32.totalorder %s22, 3
    %p260 = por %p258, %p259
    %p262 = scmp.ne.s32.totalorder %s245, %s261
    %p263 = scmp.eq.s32.totalorder %s22, 0
    %p264 = por %p262, %p263
    %p265 = scmp.le.s32.totalorder 1, %s16
    %p266 = scmp.lt.s32.totalorder %s16, 5
    %p267 = pnand %p265, %p266
    %p268 = pneg %p267
    // Predicated region
    $region9: #{mlp_forward.5} parent=5 // pred_check
      _
    $region10: #{mlp_forward.5} parent=5 // pred_check_branch
      %270 = sbr.rel (%p267) target = $region12
    $region11: #{mlp_forward.5} parent=5 // pred_region
      %s271 = ssub.s32 %s16, 1
      // Predicated region
      $region13: #{mlp_forward.5} parent=11 // pred_check
        %p272 = pneg %p63
      $region14: #{mlp_forward.5} parent=11 // pred_check_branch
        %274 = sbr.rel (%p272) target = $region16
      $region15: #{mlp_forward.5} parent=11 // pred_region
        _
      $region16: #{mlp_forward.5} parent=11 // pred_fallthru
        _
      // Predicated region
      $region17: #{mlp_forward.5} parent=11 // pred_check
        %p275 = pneg %p84
      $region18: #{mlp_forward.5} parent=11 // pred_check_branch
        %277 = sbr.rel (%p275) target = $region20
      $region19: #{mlp_forward.5} parent=11 // pred_region
        _
      $region20: #{mlp_forward.5} parent=11 // pred_fallthru
        _
      // Predicated region
      $region21: #{mlp_forward.5} parent=11 // pred_check
        %p278 = pneg %p105
      $region22: #{mlp_forward.5} parent=11 // pred_check_branch
        %280 = sbr.rel (%p278) target = $region24
      $region23: #{mlp_forward.5} parent=11 // pred_region
        _
      $region24: #{mlp_forward.5} parent=11 // pred_fallthru
        _
      // Predicated region
      $region25: #{mlp_forward.5} parent=11 // pred_check
        %p281 = pneg %p126
      $region26: #{mlp_forward.5} parent=11 // pred_check_branch
        %283 = sbr.rel (%p281) target = $region28
      $region27: #{mlp_forward.5} parent=11 // pred_region
        _
      $region28: #{mlp_forward.5} parent=11 // pred_fallthru
        _
      // Predicated region
      $region29: #{mlp_forward.5} parent=11 // pred_check
        %p284 = pneg %p147
      $region30: #{mlp_forward.5} parent=11 // pred_check_branch
        %286 = sbr.rel (%p284) target = $region32
      $region31: #{mlp_forward.5} parent=11 // pred_region
        _
      $region32: #{mlp_forward.5} parent=11 // pred_fallthru
        _
      // Predicated region
      $region33: #{mlp_forward.5} parent=11 // pred_check
        %p287 = pneg %p168
      $region34: #{mlp_forward.5} parent=11 // pred_check_branch
        %289 = sbr.rel (%p287) target = $region36
      $region35: #{mlp_forward.5} parent=11 // pred_region
        _
      $region36: #{mlp_forward.5} parent=11 // pred_fallthru
        _
      // Predicated region
      $region37: #{mlp_forward.5} parent=11 // pred_check
        %p290 = pneg %p189
      $region38: #{mlp_forward.5} parent=11 // pred_check_branch
        %292 = sbr.rel (%p290) target = $region40
      $region39: #{mlp_forward.5} parent=11 // pred_region
        _
      $region40: #{mlp_forward.5} parent=11 // pred_fallthru
        _
      // Predicated region
      $region41: #{mlp_forward.5} parent=11 // pred_check
        %p293 = pneg %p210
      $region42: #{mlp_forward.5} parent=11 // pred_check_branch
        %295 = sbr.rel (%p293) target = $region44
      $region43: #{mlp_forward.5} parent=11 // pred_region
        _
      $region44: #{mlp_forward.5} parent=11 // pred_fallthru
        _
      // Predicated region
      $region45: #{mlp_forward.5} parent=11 // pred_check
        %p296 = pneg %p231
      $region46: #{mlp_forward.5} parent=11 // pred_check_branch
        %298 = sbr.rel (%p296) target = $region48
      $region47: #{mlp_forward.5} parent=11 // pred_region
        _
      $region48: #{mlp_forward.5} parent=11 // pred_fallthru
        _
    $region12: #{mlp_forward.5} parent=5 // pred_fallthru
      _
    %p299 = scmp.lt.s32.totalorder %s16, 4
    // Predicated region
    $region49: #{mlp_forward.5} parent=5 // pred_check
      %p300 = pneg %p299
    $region50: #{mlp_forward.5} parent=5 // pred_check_branch
      %302 = sbr.rel (%p300) target = $region52
    $region51: #{mlp_forward.5} parent=5 // pred_region
      // Predicated region
      $region53: #{mlp_forward.5} parent=51 // pred_check
        %p303 = pneg %p36
      $region54: #{mlp_forward.5} parent=51 // pred_check_branch
        %305 = sbr.rel (%p303) target = $region56
      $region55: #{mlp_forward.5} parent=51 // pred_region
        %s306 = smul.u32 16, %s16
        %p307 = scmp.lt.s32.totalorder %s306, 63
        %s308 = scalar_select %p307, %s306, 63
        %s309 = smul.addr %s308, 8
        %s310 = scalar_lea.vmem %s0, %s309
        %s311 = smul.u32 16, %s16
      $region56: #{mlp_forward.5} parent=51 // pred_fallthru
        _
    $region52: #{mlp_forward.5} parent=5 // pred_fallthru
      _
    %p312 = scmp.le.s32.totalorder 1, %s16
    %p313 = scmp.lt.s32.totalorder %s16, 5
    %p314 = pnand %p312, %p313
    %p315 = pneg %p314
    // Predicated region
    $region57: #{mlp_forward.5} parent=5 // pred_check
      _
    $region58: #{mlp_forward.5} parent=5 // pred_check_branch
      %317 = sbr.rel (%p314) target = $region60
    $region59: #{mlp_forward.5} parent=5 // pred_region
      %s318 = ssub.s32 %s16, 1
      %s319 = smul.u32 16, %s21
      %p320 = scmp.lt.s32.totalorder %s319, 63
      %s321 = scalar_select %p320, %s319, 63
      %s322 = smul.addr %s321, 8
      %s323 = scalar_lea.vmem %s0, %s322
      %p324 = pneg %p42
      %p325 = pneg %p39
      %p326 = pneg %p63
      %p327 = pneg %p60
      %p328 = pneg %p84
      %p329 = pneg %p81
      %p330 = pneg %p105
      %p331 = pneg %p102
      %p332 = pneg %p126
      %p333 = pneg %p123
      %p334 = pneg %p147
      %p335 = pneg %p144
      %p336 = pneg %p168
      %p337 = pneg %p165
      %p338 = pneg %p189
      %p339 = pneg %p186
      %p340 = pneg %p210
      %p341 = pneg %p207
      %p342 = pneg %p231
      %p343 = pneg %p228
      %p344 = pneg %p257
      %p345 = pneg %p254
      %s346 = smul.u32 16, %s21
      %p347 = scmp.lt.s32.totalorder %s346, 63
      %s348 = scalar_select %p347, %s346, 63
      %s349 = smul.addr %s348, 8
      %s350 = scalar_lea.vmem %s10, %s349
      %s351 = smul.u32 16, %s21
      %p352 = scmp.lt.s32.totalorder %s351, 63
      %s353 = scalar_select %p352, %s351, 63
      %s354 = smul.addr %s353, 8
      %s355 = scalar_lea.vmem %s0, %s354
      %s356 = smul.u32 16, %s21
      %s357 = smul.u32 16, %s21
      %p358 = scmp.lt.s32.totalorder %s357, 63
      %s359 = scalar_select %p358, %s357, 63
      %s360 = smul.addr %s359, 8
      %s361 = scalar_lea.vmem %s10, %s360
      %s362 = smul.u32 16, %s21
      %v364 = vld [vmem:[%s355] sm:$0xff]
      %v365 = vld [vmem:[%s355 + $0x8] sm:$0xff]
      %v366 = vld [vmem:[%s355 + $0x10] sm:$0xff]
      %v367 = vld [vmem:[%s355 + $0x18] sm:$0xff]
      %v368 = vld [vmem:[%s355 + $0x20] sm:$0xff]
      %v369 = vld [vmem:[%s355 + $0x28] sm:$0xff]
      %v370 = vld [vmem:[%s355 + $0x30] sm:$0xff]
      %v371 = vld [vmem:[%s355 + $0x38] sm:$0xff]
      %v372 = vld [vmem:[%s355 + $0x40] sm:$0xff]
      %v373 = vld [vmem:[%s355 + $0x48] sm:$0xff]
      %v374 = vld [vmem:[%s355 + $0x50] sm:$0xff]
      %v375 = vld [vmem:[%s355 + $0x58] sm:$0xff]
      %v376 = vld [vmem:[%s355 + $0x60] sm:$0xff]
      %v377 = vld [vmem:[%s355 + $0x68] sm:$0xff]
      %v378 = vld [vmem:[%s355 + $0x70] sm:$0xff]
      %v379 = vld [vmem:[%s355 + $0x78] sm:$0xff]
      %v380 = vpack.c.bf16 %v365, %v364
      %v381 = vpack.c.bf16 %v367, %v366
      %v382 = vpack.c.bf16 %v369, %v368
      %v383 = vpack.c.bf16 %v371, %v370
      %v384 = vpack.c.bf16 %v373, %v372
      %v385 = vpack.c.bf16 %v375, %v374
      %v386 = vpack.c.bf16 %v377, %v376
      %v387 = vpack.c.bf16 %v379, %v378
      %v388 = vld [vmem:[%s1] sm:$0xf]
      %v389 = vld [vmem:[%s1 + $0x4] sm:$0xf]
      %v390 = vld [vmem:[%s1 + $0x8] sm:$0xf]
      %v391 = vld [vmem:[%s1 + $0xc] sm:$0xf]
      %v392 = vld [vmem:[%s1 + $0x10] sm:$0xf]
      %v393 = vld [vmem:[%s1 + $0x14] sm:$0xf]
      %v394 = vld [vmem:[%s1 + $0x18] sm:$0xf]
      %v395 = vld [vmem:[%s1 + $0x1c] sm:$0xf]
      %v396 = vld [vmem:[%s2] sm:$0x1]
      %v398 = vlaneseq
      %v399 = vshrl.u32 %v398, 7
      %v400 = vsub.s32 0, %v399
      %v401 = vrot.slane %v396, %v400
      %v411 = vunpack.c.l.b16 %v388
      %v412 = vunpack.c.l.b16 %v389
      %v413 = vunpack.c.l.b16 %v390
      %v414 = vunpack.c.l.b16 %v391
      %v415 = vunpack.c.l.b16 %v392
      %v416 = vunpack.c.l.b16 %v393
      %v417 = vunpack.c.l.b16 %v394
      %v418 = vunpack.c.l.b16 %v395
      %v419 = vpack.c.b16 %v412, %v411
      %v420 = vpack.c.b16 %v414, %v413
      %v421 = vpack.c.b16 %v416, %v415
      %v422 = vpack.c.b16 %v418, %v417
      %vm427 = vcmask 523264
      %v429 = vsel %vm427, %v380, 0
      %v432 = vsel %vm427, %v381, 0
      %v435 = vsel %vm427, %v382, 0
      %v438 = vsel %vm427, %v383, 0
      %v441 = vsel %vm427, %v384, 0
      %v444 = vsel %vm427, %v385, 0
      %v447 = vsel %vm427, %v386, 0
      %v450 = vsel %vm427, %v387, 0
      %452 = vmatprep.subr.bf16.mxu0 0
      %453 = vmatpush1.bf16.msra.mxu0 %v419
      %454 = vmatprep.subr.bf16.mxu0 0
      %455 = vmatpush1.bf16.msra.mxu0 %v420
      %456 = vmatprep.subr.bf16.mxu0 0
      %457 = vmatpush1.bf16.msra.mxu0 %v421
      %458 = vmatprep.subr.bf16.mxu0 0
      %459 = vmatpush1.bf16.msra.mxu0 %v422
      %460 = vmatprep.subr.bf16.mxu0 0
      %461 = vmatpush1.bf16.msra.mxu0 0
      %462 = vmatprep.subr.bf16.mxu0 0
      %463 = vmatpush1.bf16.msra.mxu0 0
      %464 = vmatprep.subr.bf16.mxu0 0
      %465 = vmatpush1.bf16.msra.mxu0 0
      %466 = vmatprep.subr.bf16.mxu0 0
      %467 = vmatpush1.bf16.msra.mxu0 0
      %468 = vmatprep.subr.bf16.mxu0 0
      %469 = vmatpush1.bf16.msra.mxu0 0
      %470 = vmatprep.subr.bf16.mxu0 0
      %471 = vmatpush1.bf16.msra.mxu0 0
      %472 = vmatprep.subr.bf16.mxu0 0
      %473 = vmatpush1.bf16.msra.mxu0 0
      %474 = vmatprep.subr.bf16.mxu0 0
      %475 = vmatpush1.bf16.msra.mxu0 0
      %476 = vmatprep.subr.bf16.mxu0 0
      %477 = vmatpush1.bf16.msra.mxu0 0
      %478 = vmatprep.subr.bf16.mxu0 0
      %479 = vmatpush1.bf16.msra.mxu0 0
      %480 = vmatprep.subr.bf16.mxu0 0
      %481 = vmatpush1.bf16.msra.mxu0 0
      %482 = vmatprep.subr.bf16.mxu0 0
      %483 = vmatpush1.bf16.msra.mxu0 0
      %484 = vmatprep.mubr.bf16.mxu0 0
      %485 = vmatmul.mubr.bf16.gmra.mrb[0].mxu0 %v429
      %v486 = vpop.f32.mrb[0].mxu0
      %v487 = vadd.f32 %v401, %v486
      %v488 = vpop.f32.mrb[0].mxu0
      %v489 = vpop.f32.mrb[0].mxu0
      %v490 = vadd.f32 %v401, %v489
      %v491 = vpop.f32.mrb[0].mxu0
      %492 = vmatprep.mubr.bf16.mxu0 0
      %493 = vmatmul.mubr.bf16.gmra.mrb[0].mxu0 %v432
      %v494 = vpop.f32.mrb[0].mxu0
      %v495 = vadd.f32 %v401, %v494
      %v496 = vpop.f32.mrb[0].mxu0
      %v497 = vpop.f32.mrb[0].mxu0
      %v498 = vadd.f32 %v401, %v497
      %v499 = vpop.f32.mrb[0].mxu0
      %500 = vmatprep.mubr.bf16.mxu0 0
      %501 = vmatmul.mubr.bf16.gmra.mrb[0].mxu0 %v435
      %v502 = vpop.f32.mrb[0].mxu0
      %v503 = vadd.f32 %v401, %v502
      %v504 = vpop.f32.mrb[0].mxu0
      %v505 = vpop.f32.mrb[0].mxu0
      %v506 = vadd.f32 %v401, %v505
      %v507 = vpop.f32.mrb[0].mxu0
      %508 = vmatprep.mubr.bf16.mxu0 0
      %509 = vmatmul.mubr.bf16.gmra.mrb[0].mxu0 %v438
      %v510 = vpop.f32.mrb[0].mxu0
      %v511 = vadd.f32 %v401, %v510
      %v512 = vpop.f32.mrb[0].mxu0
      %v513 = vpop.f32.mrb[0].mxu0
      %v514 = vadd.f32 %v401, %v513
      %v515 = vpop.f32.mrb[0].mxu0
      %516 = vmatprep.mubr.bf16.mxu0 0
      %517 = vmatmul.mubr.bf16.gmra.mrb[0].mxu0 %v441
      %v518 = vpop.f32.mrb[0].mxu0
      %v519 = vadd.f32 %v401, %v518
      %v520 = vpop.f32.mrb[0].mxu0
      %v521 = vpop.f32.mrb[0].mxu0
      %v522 = vadd.f32 %v401, %v521
      %v523 = vpop.f32.mrb[0].mxu0
      %524 = vmatprep.mubr.bf16.mxu0 0
      %525 = vmatmul.mubr.bf16.gmra.mrb[0].mxu0 %v444
      %v526 = vpop.f32.mrb[0].mxu0
      %v527 = vadd.f32 %v401, %v526
      %v528 = vpop.f32.mrb[0].mxu0
      %v529 = vpop.f32.mrb[0].mxu0
      %v530 = vadd.f32 %v401, %v529
      %v531 = vpop.f32.mrb[0].mxu0
      %532 = vmatprep.mubr.bf16.mxu0 0
      %533 = vmatmul.mubr.bf16.gmra.mrb[0].mxu0 %v447
      %v534 = vpop.f32.mrb[0].mxu0
      %v535 = vadd.f32 %v401, %v534
      %v536 = vpop.f32.mrb[0].mxu0
      %v537 = vpop.f32.mrb[0].mxu0
      %v538 = vadd.f32 %v401, %v537
      %v539 = vpop.f32.mrb[0].mxu0
      %540 = vmatprep.mubr.bf16.mxu0 0
      %541 = vmatmul.mubr.bf16.gmra.mrb[0].mxu0 %v450
      %v542 = vpop.f32.mrb[0].mxu0
      %v543 = vadd.f32 %v401, %v542
      %v544 = vpop.f32.mrb[0].mxu0
      %v545 = vpop.f32.mrb[0].mxu0
      %v546 = vadd.f32 %v401, %v545
      %v547 = vpop.f32.mrb[0].mxu0
      %548 = vdwg.mxu0
      %v549 = vld [vmem:[%s3] sm:$0x1]
      %v550 = vld [vmem:[%s4] sm:$0x1]
      %v552 = vlaneseq
      %v553 = vshrl.u32 %v552, 7
      %v554 = vsub.s32 0, %v553
      %v555 = vrot.slane %v549, %v554
      %v557 = vsub.f32 %v487, %v555
      %v558 = vsub.f32 %v490, %v555
      %v559 = vsub.f32 %v495, %v555
      %v560 = vsub.f32 %v498, %v555
      %v561 = vsub.f32 %v503, %v555
      %v562 = vsub.f32 %v506, %v555
      %v563 = vsub.f32 %v511, %v555
      %v564 = vsub.f32 %v514, %v555
      %v565 = vsub.f32 %v519, %v555
      %v566 = vsub.f32 %v522, %v555
      %v567 = vsub.f32 %v527, %v555
      %v568 = vsub.f32 %v530, %v555
      %v569 = vsub.f32 %v535, %v555
      %v570 = vsub.f32 %v538, %v555
      %v571 = vsub.f32 %v543, %v555
      %v572 = vsub.f32 %v546, %v555
      %v574 = vlaneseq
      %v575 = vshrl.u32 %v574, 7
      %v576 = vsub.s32 0, %v575
      %v577 = vrot.slane %v550, %v576
      %v579 = vmul.f32 %v557, %v577
      %v580 = vmul.f32 %v558, %v577
      %v581 = vmul.f32 %v559, %v577
      %v582 = vmul.f32 %v560, %v577
      %v583 = vmul.f32 %v561, %v577
      %v584 = vmul.f32 %v562, %v577
      %v585 = vmul.f32 %v563, %v577
      %v586 = vmul.f32 %v564, %v577
      %v587 = vmul.f32 %v565, %v577
      %v588 = vmul.f32 %v566, %v577
      %v589 = vmul.f32 %v567, %v577
      %v590 = vmul.f32 %v568, %v577
      %v591 = vmul.f32 %v569, %v577
      %v592 = vmul.f32 %v570, %v577
      %v593 = vmul.f32 %v571, %v577
      %v594 = vmul.f32 %v572, %v577
      %vm595 = vcmp.ge.f32.partialorder %v579, 0.0
      %vm596 = vcmp.ge.f32.partialorder %v580, 0.0
      %vm597 = vcmp.ge.f32.partialorder %v581, 0.0
      %vm598 = vcmp.ge.f32.partialorder %v582, 0.0
      %vm599 = vcmp.ge.f32.partialorder %v583, 0.0
      %vm600 = vcmp.ge.f32.partialorder %v584, 0.0
      %vm601 = vcmp.ge.f32.partialorder %v585, 0.0
      %vm602 = vcmp.ge.f32.partialorder %v586, 0.0
      %vm603 = vcmp.ge.f32.partialorder %v587, 0.0
      %vm604 = vcmp.ge.f32.partialorder %v588, 0.0
      %vm605 = vcmp.ge.f32.partialorder %v589, 0.0
      %vm606 = vcmp.ge.f32.partialorder %v590, 0.0
      %vm607 = vcmp.ge.f32.partialorder %v591, 0.0
      %vm608 = vcmp.ge.f32.partialorder %v592, 0.0
      %vm609 = vcmp.ge.f32.partialorder %v593, 0.0
      %vm610 = vcmp.ge.f32.partialorder %v594, 0.0
      %v611 = vmul.f32 %v579, 0.2
      %v612 = vmul.f32 %v580, 0.2
      %v613 = vmul.f32 %v581, 0.2
      %v614 = vmul.f32 %v582, 0.2
      %v615 = vmul.f32 %v583, 0.2
      %v616 = vmul.f32 %v584, 0.2
      %v617 = vmul.f32 %v585, 0.2
      %v618 = vmul.f32 %v586, 0.2
      %v619 = vmul.f32 %v587, 0.2
      %v620 = vmul.f32 %v588, 0.2
      %v621 = vmul.f32 %v589, 0.2
      %v622 = vmul.f32 %v590, 0.2
      %v623 = vmul.f32 %v591, 0.2
      %v624 = vmul.f32 %v592, 0.2
      %v625 = vmul.f32 %v593, 0.2
      %v626 = vmul.f32 %v594, 0.2
      %v627 = vsel %vm595, %v579, %v611
      %v628 = vsel %vm596, %v580, %v612
      %v629 = vsel %vm597, %v581, %v613
      %v630 = vsel %vm598, %v582, %v614
      %v631 = vsel %vm599, %v583, %v615
      %v632 = vsel %vm600, %v584, %v616
      %v633 = vsel %vm601, %v585, %v617
      %v634 = vsel %vm602, %v586, %v618
      %v635 = vsel %vm603, %v587, %v619
      %v636 = vsel %vm604, %v588, %v620
      %v637 = vsel %vm605, %v589, %v621
      %v638 = vsel %vm606, %v590, %v622
      %v639 = vsel %vm607, %v591, %v623
      %v640 = vsel %vm608, %v592, %v624
      %v641 = vsel %vm609, %v593, %v625
      %v642 = vsel %vm610, %v594, %v626
      %v643 = vpack.c.bf16 %v628, %v627
      %v644 = vpack.c.bf16 %v630, %v629
      %v645 = vpack.c.bf16 %v632, %v631
      %v646 = vpack.c.bf16 %v634, %v633
      %v647 = vpack.c.bf16 %v636, %v635
      %v648 = vpack.c.bf16 %v638, %v637
      %v649 = vpack.c.bf16 %v640, %v639
      %v650 = vpack.c.bf16 %v642, %v641
      %v651 = vld [vmem:[%s7] sm:$0xf]
      %v652 = vld [vmem:[%s7 + $0x4] sm:$0xf]
      %v653 = vld [vmem:[%s7 + $0x8] sm:$0xf]
      %v654 = vld [vmem:[%s7 + $0xc] sm:$0xf]
      %v655 = vld [vmem:[%s7 + $0x10] sm:$0xf]
      %v656 = vld [vmem:[%s7 + $0x14] sm:$0xf]
      %v657 = vld [vmem:[%s7 + $0x18] sm:$0xf]
      %v658 = vld [vmem:[%s7 + $0x1c] sm:$0xf]
      %v659 = vld [vmem:[%s7 + $0x20] sm:$0xf]
      %v660 = vld [vmem:[%s7 + $0x24] sm:$0xf]
      %v661 = vld [vmem:[%s7 + $0x28] sm:$0xf]
      %v662 = vld [vmem:[%s7 + $0x2c] sm:$0xf]
      %v663 = vld [vmem:[%s7 + $0x30] sm:$0xf]
      %v664 = vld [vmem:[%s7 + $0x34] sm:$0xf]
      %v665 = vld [vmem:[%s7 + $0x38] sm:$0xf]
      %v666 = vld [vmem:[%s7 + $0x3c] sm:$0xf]
      %v667 = vld [vmem:[%s8] sm:$0x1]
      %v669 = vlaneseq
      %v670 = vshrl.u32 %v669, 7
      %v671 = vsub.s32 0, %v670
      %v672 = vrot.slane %v667, %v671
      %v690 = vunpack.c.l.b16 %v651
      %v691 = vunpack.c.l.b16 %v652
      %v692 = vunpack.c.l.b16 %v653
      %v693 = vunpack.c.l.b16 %v654
      %v694 = vunpack.c.l.b16 %v655
      %v695 = vunpack.c.l.b16 %v656
      %v696 = vunpack.c.l.b16 %v657
      %v697 = vunpack.c.l.b16 %v658
      %v698 = vunpack.c.l.b16 %v659
      %v699 = vunpack.c.l.b16 %v660
      %v700 = vunpack.c.l.b16 %v661
      %v701 = vunpack.c.l.b16 %v662
      %v702 = vunpack.c.l.b16 %v663
      %v703 = vunpack.c.l.b16 %v664
      %v704 = vunpack.c.l.b16 %v665
      %v705 = vunpack.c.l.b16 %v666
      %v706 = vpack.c.b16 %v691, %v690
      %v707 = vpack.c.b16 %v693, %v692
      %v708 = vpack.c.b16 %v695, %v694
      %v709 = vpack.c.b16 %v697, %v696
      %v710 = vpack.c.b16 %v699, %v698
      %v711 = vpack.c.b16 %v701, %v700
      %v712 = vpack.c.b16 %v703, %v702
      %v713 = vpack.c.b16 %v705, %v704
      %722 = vmatprep.subr.bf16.mxu0 0
      %723 = vmatpush1.bf16.msra.mxu0 %v706
      %724 = vmatprep.subr.bf16.mxu0 0
      %725 = vmatpush1.bf16.msra.mxu0 %v707
      %726 = vmatprep.subr.bf16.mxu0 0
      %727 = vmatpush1.bf16.msra.mxu0 %v708
      %728 = vmatprep.subr.bf16.mxu0 0
      %729 = vmatpush1.bf16.msra.mxu0 %v709
      %730 = vmatprep.subr.bf16.mxu0 0
      %731 = vmatpush1.bf16.msra.mxu0 %v710
      %732 = vmatprep.subr.bf16.mxu0 0
      %733 = vmatpush1.bf16.msra.mxu0 %v711
      %734 = vmatprep.subr.bf16.mxu0 0
      %735 = vmatpush1.bf16.msra.mxu0 %v712
      %736 = vmatprep.subr.bf16.mxu0 0
      %737 = vmatpush1.bf16.msra.mxu0 %v713
      %738 = vmatprep.subr.bf16.mxu0 0
      %739 = vmatpush1.bf16.msra.mxu0 0
      %740 = vmatprep.subr.bf16.mxu0 0
      %741 = vmatpush1.bf16.msra.mxu0 0
      %742 = vmatprep.subr.bf16.mxu0 0
      %743 = vmatpush1.bf16.msra.mxu0 0
      %744 = vmatprep.subr.bf16.mxu0 0
      %745 = vmatpush1.bf16.msra.mxu0 0
      %746 = vmatprep.subr.bf16.mxu0 0
      %747 = vmatpush1.bf16.msra.mxu0 0
      %748 = vmatprep.subr.bf16.mxu0 0
      %749 = vmatpush1.bf16.msra.mxu0 0
      %750 = vmatprep.subr.bf16.mxu0 0
      %751 = vmatpush1.bf16.msra.mxu0 0
      %752 = vmatprep.subr.bf16.mxu0 0
      %753 = vmatpush1.bf16.msra.mxu0 0
      %754 = vmatprep.mubr.bf16.mxu0 0
      %755 = vmatmul.mubr.bf16.gmra.mrb[0].mxu0 %v643
      %v756 = vpop.f32.mrb[0].mxu0
      %v757 = vadd.f32 %v672, %v756
      %v758 = vpop.f32.mrb[0].mxu0
      %v759 = vpop.f32.mrb[0].mxu0
      %v760 = vadd.f32 %v672, %v759
      %v761 = vpop.f32.mrb[0].mxu0
      %762 = vmatprep.mubr.bf16.mxu0 0
      %763 = vmatmul.mubr.bf16.gmra.mrb[0].mxu0 %v644
      %v764 = vpop.f32.mrb[0].mxu0
      %v765 = vadd.f32 %v672, %v764
      %v766 = vpop.f32.mrb[0].mxu0
      %v767 = vpop.f32.mrb[0].mxu0
      %v768 = vadd.f32 %v672, %v767
      %v769 = vpop.f32.mrb[0].mxu0
      %770 = vmatprep.mubr.bf16.mxu0 0
      %771 = vmatmul.mubr.bf16.gmra.mrb[0].mxu0 %v645
      %v772 = vpop.f32.mrb[0].mxu0
      %v773 = vadd.f32 %v672, %v772
      %v774 = vpop.f32.mrb[0].mxu0
      %v775 = vpop.f32.mrb[0].mxu0
      %v776 = vadd.f32 %v672, %v775
      %v777 = vpop.f32.mrb[0].mxu0
      %778 = vmatprep.mubr.bf16.mxu0 0
      %779 = vmatmul.mubr.bf16.gmra.mrb[0].mxu0 %v646
      %v780 = vpop.f32.mrb[0].mxu0
      %v781 = vadd.f32 %v672, %v780
      %v782 = vpop.f32.mrb[0].mxu0
      %v783 = vpop.f32.mrb[0].mxu0
      %v784 = vadd.f32 %v672, %v783
      %v785 = vpop.f32.mrb[0].mxu0
      %786 = vmatprep.mubr.bf16.mxu0 0
      %787 = vmatmul.mubr.bf16.gmra.mrb[0].mxu0 %v647
      %v788 = vpop.f32.mrb[0].mxu0
      %v789 = vadd.f32 %v672, %v788
      %v790 = vpop.f32.mrb[0].mxu0
      %v791 = vpop.f32.mrb[0].mxu0
      %v792 = vadd.f32 %v672, %v791
      %v793 = vpop.f32.mrb[0].mxu0
      %794 = vmatprep.mubr.bf16.mxu0 0
      %795 = vmatmul.mubr.bf16.gmra.mrb[0].mxu0 %v648
      %v796 = vpop.f32.mrb[0].mxu0
      %v797 = vadd.f32 %v672, %v796
      %v798 = vpop.f32.mrb[0].mxu0
      %v799 = vpop.f32.mrb[0].mxu0
      %v800 = vadd.f32 %v672, %v799
      %v801 = vpop.f32.mrb[0].mxu0
      %802 = vmatprep.mubr.bf16.mxu0 0
      %803 = vmatmul.mubr.bf16.gmra.mrb[0].mxu0 %v649
      %v804 = vpop.f32.mrb[0].mxu0
      %v805 = vadd.f32 %v672, %v804
      %v806 = vpop.f32.mrb[0].mxu0
      %v807 = vpop.f32.mrb[0].mxu0
      %v808 = vadd.f32 %v672, %v807
      %v809 = vpop.f32.mrb[0].mxu0
      %810 = vmatprep.mubr.bf16.mxu0 0
      %811 = vmatmul.mubr.bf16.gmra.mrb[0].mxu0 %v650
      %v812 = vpop.f32.mrb[0].mxu0
      %v813 = vadd.f32 %v672, %v812
      %v814 = vpop.f32.mrb[0].mxu0
      %v815 = vpop.f32.mrb[0].mxu0
      %v816 = vadd.f32 %v672, %v815
      %v817 = vpop.f32.mrb[0].mxu0
      %818 = vdwg.mxu0
      %v819 = vld [vmem:[%s5] sm:$0x1]
      %v820 = vld [vmem:[%s6] sm:$0x1]
      %v822 = vlaneseq
      %v823 = vshrl.u32 %v822, 7
      %v824 = vsub.s32 0, %v823
      %v825 = vrot.slane %v819, %v824
      %v827 = vsub.f32 %v757, %v825
      %v828 = vsub.f32 %v760, %v825
      %v829 = vsub.f32 %v765, %v825
      %v830 = vsub.f32 %v768, %v825
      %v831 = vsub.f32 %v773, %v825
      %v832 = vsub.f32 %v776, %v825
      %v833 = vsub.f32 %v781, %v825
      %v834 = vsub.f32 %v784, %v825
      %v835 = vsub.f32 %v789, %v825
      %v836 = vsub.f32 %v792, %v825
      %v837 = vsub.f32 %v797, %v825
      %v838 = vsub.f32 %v800, %v825
      %v839 = vsub.f32 %v805, %v825
      %v840 = vsub.f32 %v808, %v825
      %v841 = vsub.f32 %v813, %v825
      %v842 = vsub.f32 %v816, %v825
      %v844 = vlaneseq
      %v845 = vshrl.u32 %v844, 7
      %v846 = vsub.s32 0, %v845
      %v847 = vrot.slane %v820, %v846
      %v849 = vmul.f32 %v827, %v847
      %v850 = vmul.f32 %v828, %v847
      %v851 = vmul.f32 %v829, %v847
      %v852 = vmul.f32 %v830, %v847
      %v853 = vmul.f32 %v831, %v847
      %v854 = vmul.f32 %v832, %v847
      %v855 = vmul.f32 %v833, %v847
      %v856 = vmul.f32 %v834, %v847
      %v857 = vmul.f32 %v835, %v847
      %v858 = vmul.f32 %v836, %v847
      %v859 = vmul.f32 %v837, %v847
      %v860 = vmul.f32 %v838, %v847
      %v861 = vmul.f32 %v839, %v847
      %v862 = vmul.f32 %v840, %v847
      %v863 = vmul.f32 %v841, %v847
      %v864 = vmul.f32 %v842, %v847
      %vm865 = vcmp.ge.f32.partialorder %v849, 0.0
      %vm866 = vcmp.ge.f32.partialorder %v850, 0.0
      %vm867 = vcmp.ge.f32.partialorder %v851, 0.0
      %vm868 = vcmp.ge.f32.partialorder %v852, 0.0
      %vm869 = vcmp.ge.f32.partialorder %v853, 0.0
      %vm870 = vcmp.ge.f32.partialorder %v854, 0.0
      %vm871 = vcmp.ge.f32.partialorder %v855, 0.0
      %vm872 = vcmp.ge.f32.partialorder %v856, 0.0
      %vm873 = vcmp.ge.f32.partialorder %v857, 0.0
      %vm874 = vcmp.ge.f32.partialorder %v858, 0.0
      %vm875 = vcmp.ge.f32.partialorder %v859, 0.0
      %vm876 = vcmp.ge.f32.partialorder %v860, 0.0
      %vm877 = vcmp.ge.f32.partialorder %v861, 0.0
      %vm878 = vcmp.ge.f32.partialorder %v862, 0.0
      %vm879 = vcmp.ge.f32.partialorder %v863, 0.0
      %vm880 = vcmp.ge.f32.partialorder %v864, 0.0
      %v881 = vmul.f32 %v849, 0.2
      %v882 = vmul.f32 %v850, 0.2
      %v883 = vmul.f32 %v851, 0.2
      %v884 = vmul.f32 %v852, 0.2
      %v885 = vmul.f32 %v853, 0.2
      %v886 = vmul.f32 %v854, 0.2
      %v887 = vmul.f32 %v855, 0.2
      %v888 = vmul.f32 %v856, 0.2
      %v889 = vmul.f32 %v857, 0.2
      %v890 = vmul.f32 %v858, 0.2
      %v891 = vmul.f32 %v859, 0.2
      %v892 = vmul.f32 %v860, 0.2
      %v893 = vmul.f32 %v861, 0.2
      %v894 = vmul.f32 %v862, 0.2
      %v895 = vmul.f32 %v863, 0.2
      %v896 = vmul.f32 %v864, 0.2
      %v897 = vsel %vm865, %v849, %v881
      %v898 = vsel %vm866, %v850, %v882
      %v899 = vsel %vm867, %v851, %v883
      %v900 = vsel %vm868, %v852, %v884
      %v901 = vsel %vm869, %v853, %v885
      %v902 = vsel %vm870, %v854, %v886
      %v903 = vsel %vm871, %v855, %v887
      %v904 = vsel %vm872, %v856, %v888
      %v905 = vsel %vm873, %v857, %v889
      %v906 = vsel %vm874, %v858, %v890
      %v907 = vsel %vm875, %v859, %v891
      %v908 = vsel %vm876, %v860, %v892
      %v909 = vsel %vm877, %v861, %v893
      %v910 = vsel %vm878, %v862, %v894
      %v911 = vsel %vm879, %v863, %v895
      %v912 = vsel %vm880, %v864, %v896
      %v913 = vadd.f32 %v627, %v897
      %v914 = vadd.f32 %v628, %v898
      %v915 = vadd.f32 %v629, %v899
      %v916 = vadd.f32 %v630, %v900
      %v917 = vadd.f32 %v631, %v901
      %v918 = vadd.f32 %v632, %v902
      %v919 = vadd.f32 %v633, %v903
      %v920 = vadd.f32 %v634, %v904
      %v921 = vadd.f32 %v635, %v905
      %v922 = vadd.f32 %v636, %v906
      %v923 = vadd.f32 %v637, %v907
      %v924 = vadd.f32 %v638, %v908
      %v925 = vadd.f32 %v639, %v909
      %v926 = vadd.f32 %v640, %v910
      %v927 = vadd.f32 %v641, %v911
      %v928 = vadd.f32 %v642, %v912
      %v929 = vld [vmem:[%s9] sm:$0x1]
      %v931 = vlaneseq
      %v932 = vshrl.u32 %v931, 7
      %v933 = vsub.s32 0, %v932
      %v934 = vrot.slane %v929, %v933
      %v936 = vmul.f32 %v913, %v934
      %v937 = vmul.f32 %v914, %v934
      %v938 = vmul.f32 %v915, %v934
      %v939 = vmul.f32 %v916, %v934
      %v940 = vmul.f32 %v917, %v934
      %v941 = vmul.f32 %v918, %v934
      %v942 = vmul.f32 %v919, %v934
      %v943 = vmul.f32 %v920, %v934
      %v944 = vmul.f32 %v921, %v934
      %v945 = vmul.f32 %v922, %v934
      %v946 = vmul.f32 %v923, %v934
      %v947 = vmul.f32 %v924, %v934
      %v948 = vmul.f32 %v925, %v934
      %v949 = vmul.f32 %v926, %v934
      %v950 = vmul.f32 %v927, %v934
      %v951 = vmul.f32 %v928, %v934
      %952 = vadd.xlane.f32.xlu0 %v936
      %v953 = vpop.xlane.xlu0 %952
      %954 = vadd.xlane.f32.xlu0 %v937
      %v955 = vpop.xlane.xlu0 %954
      %956 = vadd.xlane.f32.xlu0 %v938
      %v957 = vpop.xlane.xlu0 %956
      %958 = vadd.xlane.f32.xlu0 %v939
      %v959 = vpop.xlane.xlu0 %958
      %960 = vadd.xlane.f32.xlu0 %v940
      %v961 = vpop.xlane.xlu0 %960
      %962 = vadd.xlane.f32.xlu0 %v941
      %v963 = vpop.xlane.xlu0 %962
      %964 = vadd.xlane.f32.xlu0 %v942
      %v965 = vpop.xlane.xlu0 %964
      %966 = vadd.xlane.f32.xlu0 %v943
      %v967 = vpop.xlane.xlu0 %966
      %968 = vadd.xlane.f32.xlu0 %v944
      %v969 = vpop.xlane.xlu0 %968
      %970 = vadd.xlane.f32.xlu0 %v945
      %v971 = vpop.xlane.xlu0 %970
      %972 = vadd.xlane.f32.xlu0 %v946
      %v973 = vpop.xlane.xlu0 %972
      %974 = vadd.xlane.f32.xlu0 %v947
      %v975 = vpop.xlane.xlu0 %974
      %976 = vadd.xlane.f32.xlu0 %v948
      %v977 = vpop.xlane.xlu0 %976
      %978 = vadd.xlane.f32.xlu0 %v949
      %v979 = vpop.xlane.xlu0 %978
      %980 = vadd.xlane.f32.xlu0 %v950
      %v981 = vpop.xlane.xlu0 %980
      %982 = vadd.xlane.f32.xlu0 %v951
      %v983 = vpop.xlane.xlu0 %982
      %vm984 = vcmask 7168
      %985 = vst.msk [vmem:[%s361] sm:$0xff] %vm984, %v953
      %986 = vst.msk [vmem:[%s361 + $0x8] sm:$0xff] %vm984, %v955
      %987 = vst.msk [vmem:[%s361 + $0x10] sm:$0xff] %vm984, %v957
      %988 = vst.msk [vmem:[%s361 + $0x18] sm:$0xff] %vm984, %v959
      %989 = vst.msk [vmem:[%s361 + $0x20] sm:$0xff] %vm984, %v961
      %990 = vst.msk [vmem:[%s361 + $0x28] sm:$0xff] %vm984, %v963
      %991 = vst.msk [vmem:[%s361 + $0x30] sm:$0xff] %vm984, %v965
      %992 = vst.msk [vmem:[%s361 + $0x38] sm:$0xff] %vm984, %v967
      %993 = vst.msk [vmem:[%s361 + $0x40] sm:$0xff] %vm984, %v969
      %994 = vst.msk [vmem:[%s361 + $0x48] sm:$0xff] %vm984, %v971
      %995 = vst.msk [vmem:[%s361 + $0x50] sm:$0xff] %vm984, %v973
      %996 = vst.msk [vmem:[%s361 + $0x58] sm:$0xff] %vm984, %v975
      %997 = vst.msk [vmem:[%s361 + $0x60] sm:$0xff] %vm984, %v977
      %998 = vst.msk [vmem:[%s361 + $0x68] sm:$0xff] %vm984, %v979
      %999 = vst.msk [vmem:[%s361 + $0x70] sm:$0xff] %vm984, %v981
      %1000 = vst.msk [vmem:[%s361 + $0x78] sm:$0xff] %vm984, %v983
      %s1001 = smul.u32 16, %s21
      %p1002 = scmp.lt.s32.totalorder %s1001, 63
      %s1003 = scalar_select %p1002, %s1001, 63
      %s1004 = smul.addr %s1003, 8
      %s1005 = scalar_lea.vmem %s10, %s1004
      // Predicated region
      $region61: #{mlp_forward.5} parent=59 // pred_check
        %p1006 = pneg %p254
      $region62: #{mlp_forward.5} parent=59 // pred_check_branch
        %1008 = sbr.rel (%p1006) target = $region64
      $region63: #{mlp_forward.5} parent=59 // pred_region
        %s1009 = smul.u32 16, %s21
      $region64: #{mlp_forward.5} parent=59 // pred_fallthru
        _
    $region60: #{mlp_forward.5} parent=5 // pred_fallthru
      _
    %p1010 = scmp.le.s32.totalorder 2, %s16
    // Predicated region
    $region65: #{mlp_forward.5} parent=5 // pred_check
      %p1011 = pneg %p1010
    $region66: #{mlp_forward.5} parent=5 // pred_check_branch
      %1013 = sbr.rel (%p1011) target = $region68
    $region67: #{mlp_forward.5} parent=5 // pred_region
      %s1014 = ssub.s32 %s16, 2
      // Predicated region
      $region69: #{mlp_forward.5} parent=67 // pred_check
        %p1015 = pneg %p260
      $region70: #{mlp_forward.5} parent=67 // pred_check_branch
        %1017 = sbr.rel (%p1015) target = $region72
      $region71: #{mlp_forward.5} parent=67 // pred_region
        %s1018 = smul.u32 16, %s22
        %p1019 = scmp.lt.s32.totalorder %s1018, 63
        %s1020 = scalar_select %p1019, %s1018, 63
        %s1021 = smul.addr %s1020, 8
        %s1022 = scalar_lea.vmem %s10, %s1021
      $region72: #{mlp_forward.5} parent=67 // pred_fallthru
        _
    $region68: #{mlp_forward.5} parent=5 // pred_fallthru
      _
  $region6: #{mlp_forward.5} parent=0 // loop_footer
    %s20 = sadd.s32 1, %s16
  $region7: #{mlp_forward.5} parent=0 // loop_footer_branch
    %15 = sbr.rel target = $region3
  $region8: #{mlp_forward.5} parent=0 // loop_exit
    _

</llo_original>
